<compile_context>
chip_gen: v7x
topology: tpu7x:2x2x1
jax: 0.10.0
libtpu: 0.0.40
codegen_flags: <defaults>
</compile_context>

<pallas_src>
import jax
import jax.numpy as jnp
from jax.experimental import pallas as pl
from jax.experimental.pallas import tpu as pltpu


# ---------------------------------------------------------------------------
# Fused kernel
# ---------------------------------------------------------------------------
def _make_fused_kernel(W_, C, P, margin, branch_taps):
    """branch_taps: per dilated branch, list of kept (row_shift, col_shift)."""

    def kernel(x_ref, w0_ref, w1_ref, w2_ref, w3_ref, w4_ref, b_ref, o_ref):
        # x_ref : (1, C, L)   flattened positions, zero-padded by `margin` both sides
        # w0/w1 : (C, C)      (Cout, Cin) for global-1x1 and 1x1 branches
        # w2/3/4: (C, Kt*C)   stacked (Cout, Kt*Cin) dilated weights
        # b_ref : (5C, 1)     all biases, branch-major
        # o_ref : (1, 5C, P)  concatenated output slab (lane-dense)
        x_c = x_ref[0, :, pl.ds(margin, P)].astype(jnp.float32)        # (C, P)
        col = jax.lax.broadcasted_iota(jnp.int32, (1, P), 1) % W_      # (1, P)

        outs = []

        # -- branch 0: global average pool -> 1x1 conv (bias/ReLU folded at end,
        #    which commutes with the spatial broadcast).
        mean = jnp.mean(x_c, axis=1, keepdims=True)                    # (C, 1)
        g = jnp.dot(w0_ref[...], mean, preferred_element_type=jnp.float32)
        outs.append(jnp.broadcast_to(g, (C, P)))

        # -- branch 1: 1x1 conv
        outs.append(jnp.dot(w1_ref[...], x_c, preferred_element_type=jnp.float32))

        # -- branches 2..4: dilated 3x3 convs, kept taps stacked along K.
        for w_ref, taps in zip((w2_ref, w3_ref, w4_ref), branch_taps):
            parts = []
            for dr, dc in taps:
                if dr == 0 and dc == 0:
                    tap = x_c
                else:
                    s = dr * W_ + dc
                    tap = x_ref[0, :, pl.ds(margin + s, P)].astype(jnp.float32)
                    if dc != 0:
                        keep = (col + dc >= 0) & (col + dc < W_)
                        tap = jnp.where(keep, tap, 0.0)
                parts.append(tap)
            stacked = parts[0] if len(parts) == 1 else jnp.concatenate(parts, axis=0)
            outs.append(jnp.dot(w_ref[...], stacked,
                                preferred_element_type=jnp.float32))

        pre = jnp.concatenate(outs, axis=0) + b_ref[...]               # (5C, P)
        o_ref[0] = jnp.maximum(pre, 0.0).astype(o_ref.dtype)           # one lane-dense store

    return kernel


# ---------------------------------------------------------------------------
# Wrapper: full ASPP forward (NCHW in -> NCHW out)
# ---------------------------------------------------------------------------
def aspp_forward(x_nchw, params):
    N, C, H, W_ = x_nchw.shape
    P = H * W_
    dils = (6, 12, 18)

    # statically drop taps that only ever touch zero padding
    branch_taps = []
    for d in dils:
        taps = [((kh - 1) * d, (kw - 1) * d)
                for kh in range(3) for kw in range(3)
                if abs((kh - 1) * d) < H and abs((kw - 1) * d) < W_]
        branch_taps.append(taps)

    # flat-padding margin: largest |row_shift*W + col_shift| among kept taps
    margin = max((abs(dr) * W_ + abs(dc)
                  for taps in branch_taps for dr, dc in taps), default=0)

    # single shared flat pad (replaces 3 separate 2-D padded copies)
    x_flat = x_nchw.reshape(N, C, P)
    x_pad = jnp.pad(x_flat, ((0, 0), (0, 0), (margin, margin)))
    L = P + 2 * margin

    # weight prep: (Cout, Cin) for 1x1s; (Cout, Kt*Cin) im2col-stacked for dilated
    w0, b0 = params["layer6_0"]
    w1, b1 = params["layer6_1"]
    w2, b2 = params["layer6_2"]
    w3, b3 = params["layer6_3"]
    w4, b4 = params["layer6_4"]

    w0t = w0[0, 0].T
    w1t = w1[0, 0].T

    def stack_w(w, taps, d):
        blocks = []
        for dr, dc in taps:
            kh = dr // d + 1
            kw = dc // d + 1
            blocks.append(w[kh, kw].T)                  # (Cout, Cin)
        return jnp.concatenate(blocks, axis=1)          # (Cout, Kt*Cin)

    w2s = stack_w(w2, branch_taps[0], dils[0])
    w3s = stack_w(w3, branch_taps[1], dils[1])
    w4s = stack_w(w4, branch_taps[2], dils[2])

    bias = jnp.concatenate([b0, b1, b2, b3, b4], axis=1).reshape(5 * C, 1)

    kernel = _make_fused_kernel(W_, C, P, margin, branch_taps)
    out = pl.pallas_call(
        kernel,
        out_shape=jax.ShapeDtypeStruct((N, 5 * C, P), x_nchw.dtype),
        grid=(N,),
        in_specs=[
            pl.BlockSpec((1, C, L), lambda n: (n, 0, 0)),
            pl.BlockSpec((C, C), lambda n: (0, 0)),
            pl.BlockSpec((C, C), lambda n: (0, 0)),
            pl.BlockSpec(w2s.shape, lambda n: (0, 0)),
            pl.BlockSpec(w3s.shape, lambda n: (0, 0)),
            pl.BlockSpec(w4s.shape, lambda n: (0, 0)),
            pl.BlockSpec((5 * C, 1), lambda n: (0, 0)),
        ],
        out_specs=pl.BlockSpec((1, 5 * C, P), lambda n: (n, 0, 0)),
        compiler_params=pltpu.CompilerParams(
            dimension_semantics=("parallel",),          # v7x: shard batch over 2 TCs
            vmem_limit_bytes=32 * 1024 * 1024,
        ),
    )(x_pad, w0t, w1t, w2s, w3s, w4s, bias)

    # (N, 5C, H*W) -> (N, 5C, H, W): trailing-dim split, no transpose needed
    return out.reshape(N, 5 * C, H, W_)


aspp_forward_jit = jax.jit(aspp_forward)


# ---------------------------------------------------------------------------
# Parameter init (deterministic, mirrors shapes of the PyTorch module)
# ---------------------------------------------------------------------------
def init_params(key, C):
    """Conv weights stored as (kh, kw, Cin, Cout); biases as (1, Cout)."""
    specs = [  # (name, K)
        ("layer6_0", 1),
        ("layer6_1", 1),
        ("layer6_2", 3),
        ("layer6_3", 3),
        ("layer6_4", 3),
    ]
    params = {}
    for name, K in specs:
        key, kw_, kb_ = jax.random.split(key, 3)
        fan_in = C * K * K
        std = (2.0 / fan_in) ** 0.5                      # kaiming_normal_
        w = std * jax.random.normal(kw_, (K, K, C, C), jnp.float32)
        bound = 1.0 / (fan_in ** 0.5)                    # torch Conv2d default bias init
        b = jax.random.uniform(kb_, (1, C), jnp.float32, -bound, bound)
        params[name] = (w, b)
    return params


# ---------------------------------------------------------------------------
# Pure-JAX reference (for correctness check)
# ---------------------------------------------------------------------------
def aspp_reference(x_nchw, params):
    def conv(x, w, b, dil):
        xn = jnp.transpose(x, (0, 2, 3, 1))
        K = w.shape[0]
        pad = dil * (K // 2)
        y = jax.lax.conv_general_dilated(
            xn, w, window_strides=(1, 1),
            padding=[(pad, pad), (pad, pad)],
            rhs_dilation=(dil, dil),
            dimension_numbers=("NHWC", "HWIO", "NHWC"),
        ) + b.reshape(1, 1, 1, -1)
        return jnp.transpose(jnp.maximum(y, 0.0), (0, 3, 1, 2))

    H, W = x_nchw.shape[-2:]
    g = jnp.mean(x_nchw, axis=(2, 3), keepdims=True)
    g = conv(g, *params["layer6_0"], dil=1)
    g = jnp.broadcast_to(g, (x_nchw.shape[0], x_nchw.shape[1], H, W))
    y1 = conv(x_nchw, *params["layer6_1"], dil=1)
    y2 = conv(x_nchw, *params["layer6_2"], dil=6)
    y3 = conv(x_nchw, *params["layer6_3"], dil=12)
    y4 = conv(x_nchw, *params["layer6_4"], dil=18)
    return jnp.concatenate([g, y1, y2, y3, y4], axis=1)


# ---------------------------------------------------------------------------
if __name__ == "__main__":
    N, C, H, W = 2, 8, 16, 16          # small synthetic shapes (out_channels=8)
    key = jax.random.PRNGKey(0)
    kx, kp = jax.random.split(key)
    x = jax.random.normal(kx, (N, C, H, W), jnp.float32)
    params = init_params(kp, C)

    out = jax.block_until_ready(aspp_forward_jit(x, params))
    assert out.shape == (N, 5 * C, H, W), out.shape

    ref = jax.block_until_ready(aspp_reference(x, params))
    assert jnp.allclose(out, ref, rtol=1e-3, atol=1e-3), float(jnp.abs(out - ref).max())

    print("KERNEL_OK")
</pallas_src>

<mosaic_0001>
module attributes {stable_mosaic.version = 11 : i64} {
  func.func @kernel(%arg0: i32, %arg1: memref<1x8x664xf32, #tpu.memory_space<vmem>>, %arg2: memref<8x8xf32, #tpu.memory_space<vmem>>, %arg3: memref<8x8xf32, #tpu.memory_space<vmem>>, %arg4: memref<8x72xf32, #tpu.memory_space<vmem>>, %arg5: memref<8x72xf32, #tpu.memory_space<vmem>>, %arg6: memref<8x8xf32, #tpu.memory_space<vmem>>, %arg7: memref<40x1xf32, #tpu.memory_space<vmem>>, %arg8: memref<1x40x256xf32, #tpu.memory_space<vmem>>) attributes {dimension_semantics = [#tpu.dimension_semantics<parallel>], iteration_bounds = array<i64: 2>, scalar_prefetch = 0 : i64, scratch_operands = 0 : i64, tpu.core_type = #tpu.core_type<tc>, window_params = [{transform_indices = @transform_0, window_bounds = array<i64: 1, 8, 664>}, {pipeline_mode = #tpu.pipeline_mode<synchronous>, transform_indices = @transform_1, window_bounds = array<i64: 8, 8>}, {pipeline_mode = #tpu.pipeline_mode<synchronous>, transform_indices = @transform_2, window_bounds = array<i64: 8, 8>}, {pipeline_mode = #tpu.pipeline_mode<synchronous>, transform_indices = @transform_3, window_bounds = array<i64: 8, 72>}, {pipeline_mode = #tpu.pipeline_mode<synchronous>, transform_indices = @transform_4, window_bounds = array<i64: 8, 72>}, {pipeline_mode = #tpu.pipeline_mode<synchronous>, transform_indices = @transform_5, window_bounds = array<i64: 8, 8>}, {pipeline_mode = #tpu.pipeline_mode<synchronous>, transform_indices = @transform_6, window_bounds = array<i64: 40, 1>}, {transform_indices = @transform_7, window_bounds = array<i64: 1, 40, 256>}]} {
    %c0 = arith.constant 0 : index
    %c0_0 = arith.constant 0 : index
    %c204 = arith.constant 204 : index
    %0 = vector.load %arg1[%c0, %c0_0, %c204] : memref<1x8x664xf32, #tpu.memory_space<vmem>>, vector<1x8x256xf32>
    %1 = vector.shape_cast %0 : vector<1x8x256xf32> to vector<8x256xf32>
    %2 = tpu.iota {dimensions = array<i32: 1>} : vector<1x256xi32>
    %c16_i32 = arith.constant 16 : i32
    %c0_i32 = arith.constant 0 : i32
    %3 = arith.cmpi eq, %c16_i32, %c0_i32 : i32
    %c1_i32 = arith.constant 1 : i32
    %4 = arith.select %3, %c1_i32, %c16_i32 : i32
    %5 = vector.broadcast %4 : i32 to vector<1x256xi32>
    %6 = arith.remsi %2, %5 : vector<1x256xi32>
    %c0_i32_1 = arith.constant 0 : i32
    %7 = vector.broadcast %c0_i32_1 : i32 to vector<1x256xi32>
    %8 = arith.cmpi ne, %6, %7 : vector<1x256xi32>
    %c0_i32_2 = arith.constant 0 : i32
    %9 = vector.broadcast %c0_i32_2 : i32 to vector<1x256xi32>
    %10 = arith.cmpi slt, %6, %9 : vector<1x256xi32>
    %c0_i32_3 = arith.constant 0 : i32
    %11 = arith.cmpi slt, %4, %c0_i32_3 : i32
    %12 = vector.broadcast %11 : i1 to vector<1x256xi1>
    %13 = vector.broadcast %12 : vector<1x256xi1> to vector<1x256xi1>
    %14 = arith.xori %10, %13 : vector<1x256xi1>
    %15 = arith.andi %14, %8 : vector<1x256xi1>
    %16 = vector.broadcast %4 : i32 to vector<1x256xi32>
    %17 = arith.addi %6, %16 : vector<1x256xi32>
    %18 = arith.select %15, %17, %6 : vector<1x256xi1>, vector<1x256xi32>
    %cst = arith.constant dense<0.000000e+00> : vector<8xf32>
    %19 = vector.multi_reduction <add>, %1, %cst [1] : vector<8x256xf32> to vector<8xf32>
    %20 = vector.shape_cast %19 : vector<8xf32> to vector<8x1xf32>
    %cst_4 = arith.constant 2.560000e+02 : f32
    %21 = vector.broadcast %cst_4 : f32 to vector<8x1xf32>
    %22 = arith.divf %20, %21 : vector<8x1xf32>
    %c0_5 = arith.constant 0 : index
    %c0_6 = arith.constant 0 : index
    %23 = vector.load %arg2[%c0_5, %c0_6] : memref<8x8xf32, #tpu.memory_space<vmem>>, vector<8x8xf32>
    %cst_7 = arith.constant dense<0.000000e+00> : vector<8x1xf32>
    %24 = tpu.matmul %23, %22, %cst_7 {dimension_numbers = #tpu.dot_dimension_numbers<[1], [0], [0], [1], [0, 0, 1, 1], [], []>} : vector<8x8xf32>, vector<8x1xf32>, vector<8x1xf32> -> vector<8x1xf32>
    %25 = vector.shape_cast %24 : vector<8x1xf32> to vector<8x1xf32>
    %26 = vector.broadcast %25 : vector<8x1xf32> to vector<8x256xf32>
    %c0_8 = arith.constant 0 : index
    %c0_9 = arith.constant 0 : index
    %27 = vector.load %arg3[%c0_8, %c0_9] : memref<8x8xf32, #tpu.memory_space<vmem>>, vector<8x8xf32>
    %cst_10 = arith.constant dense<0.000000e+00> : vector<8x256xf32>
    %28 = tpu.matmul %27, %1, %cst_10 {dimension_numbers = #tpu.dot_dimension_numbers<[1], [0], [0], [1], [0, 0, 1, 1], [], []>} : vector<8x8xf32>, vector<8x256xf32>, vector<8x256xf32> -> vector<8x256xf32>
    %c0_11 = arith.constant 0 : index
    %c0_12 = arith.constant 0 : index
    %c102 = arith.constant 102 : index
    %29 = vector.load %arg1[%c0_11, %c0_12, %c102] : memref<1x8x664xf32, #tpu.memory_space<vmem>>, vector<1x8x256xf32>
    %30 = vector.shape_cast %29 : vector<1x8x256xf32> to vector<8x256xf32>
    %c-6_i32 = arith.constant -6 : i32
    %31 = vector.broadcast %c-6_i32 : i32 to vector<1x256xi32>
    %32 = arith.addi %18, %31 : vector<1x256xi32>
    %c0_i32_13 = arith.constant 0 : i32
    %33 = vector.broadcast %c0_i32_13 : i32 to vector<1x256xi32>
    %34 = arith.cmpi sge, %32, %33 : vector<1x256xi32>
    %c-6_i32_14 = arith.constant -6 : i32
    %35 = vector.broadcast %c-6_i32_14 : i32 to vector<1x256xi32>
    %36 = arith.addi %18, %35 : vector<1x256xi32>
    %c16_i32_15 = arith.constant 16 : i32
    %37 = vector.broadcast %c16_i32_15 : i32 to vector<1x256xi32>
    %38 = arith.cmpi slt, %36, %37 : vector<1x256xi32>
    %39 = arith.andi %34, %38 : vector<1x256xi1>
    %cst_16 = arith.constant 0.000000e+00 : f32
    %40 = vector.shape_cast %39 : vector<1x256xi1> to vector<1x256xi1>
    %41 = vector.broadcast %40 : vector<1x256xi1> to vector<8x256xi1>
    %42 = vector.broadcast %cst_16 : f32 to vector<8x256xf32>
    %43 = arith.select %41, %30, %42 : vector<8x256xi1>, vector<8x256xf32>
    %c0_17 = arith.constant 0 : index
    %c0_18 = arith.constant 0 : index
    %c108 = arith.constant 108 : index
    %44 = vector.load %arg1[%c0_17, %c0_18, %c108] : memref<1x8x664xf32, #tpu.memory_space<vmem>>, vector<1x8x256xf32>
    %45 = vector.shape_cast %44 : vector<1x8x256xf32> to vector<8x256xf32>
    %c0_19 = arith.constant 0 : index
    %c0_20 = arith.constant 0 : index
    %c114 = arith.constant 114 : index
    %46 = vector.load %arg1[%c0_19, %c0_20, %c114] : memref<1x8x664xf32, #tpu.memory_space<vmem>>, vector<1x8x256xf32>
    %47 = vector.shape_cast %46 : vector<1x8x256xf32> to vector<8x256xf32>
    %c6_i32 = arith.constant 6 : i32
    %48 = vector.broadcast %c6_i32 : i32 to vector<1x256xi32>
    %49 = arith.addi %18, %48 : vector<1x256xi32>
    %c0_i32_21 = arith.constant 0 : i32
    %50 = vector.broadcast %c0_i32_21 : i32 to vector<1x256xi32>
    %51 = arith.cmpi sge, %49, %50 : vector<1x256xi32>
    %c6_i32_22 = arith.constant 6 : i32
    %52 = vector.broadcast %c6_i32_22 : i32 to vector<1x256xi32>
    %53 = arith.addi %18, %52 : vector<1x256xi32>
    %c16_i32_23 = arith.constant 16 : i32
    %54 = vector.broadcast %c16_i32_23 : i32 to vector<1x256xi32>
    %55 = arith.cmpi slt, %53, %54 : vector<1x256xi32>
    %56 = arith.andi %51, %55 : vector<1x256xi1>
    %cst_24 = arith.constant 0.000000e+00 : f32
    %57 = vector.shape_cast %56 : vector<1x256xi1> to vector<1x256xi1>
    %58 = vector.broadcast %57 : vector<1x256xi1> to vector<8x256xi1>
    %59 = vector.broadcast %cst_24 : f32 to vector<8x256xf32>
    %60 = arith.select %58, %47, %59 : vector<8x256xi1>, vector<8x256xf32>
    %c0_25 = arith.constant 0 : index
    %c0_26 = arith.constant 0 : index
    %c198 = arith.constant 198 : index
    %61 = vector.load %arg1[%c0_25, %c0_26, %c198] : memref<1x8x664xf32, #tpu.memory_space<vmem>>, vector<1x8x256xf32>
    %62 = vector.shape_cast %61 : vector<1x8x256xf32> to vector<8x256xf32>
    %c-6_i32_27 = arith.constant -6 : i32
    %63 = vector.broadcast %c-6_i32_27 : i32 to vector<1x256xi32>
    %64 = arith.addi %18, %63 : vector<1x256xi32>
    %c0_i32_28 = arith.constant 0 : i32
    %65 = vector.broadcast %c0_i32_28 : i32 to vector<1x256xi32>
    %66 = arith.cmpi sge, %64, %65 : vector<1x256xi32>
    %c-6_i32_29 = arith.constant -6 : i32
    %67 = vector.broadcast %c-6_i32_29 : i32 to vector<1x256xi32>
    %68 = arith.addi %18, %67 : vector<1x256xi32>
    %c16_i32_30 = arith.constant 16 : i32
    %69 = vector.broadcast %c16_i32_30 : i32 to vector<1x256xi32>
    %70 = arith.cmpi slt, %68, %69 : vector<1x256xi32>
    %71 = arith.andi %66, %70 : vector<1x256xi1>
    %cst_31 = arith.constant 0.000000e+00 : f32
    %72 = vector.shape_cast %71 : vector<1x256xi1> to vector<1x256xi1>
    %73 = vector.broadcast %72 : vector<1x256xi1> to vector<8x256xi1>
    %74 = vector.broadcast %cst_31 : f32 to vector<8x256xf32>
    %75 = arith.select %73, %62, %74 : vector<8x256xi1>, vector<8x256xf32>
    %c0_32 = arith.constant 0 : index
    %c0_33 = arith.constant 0 : index
    %c210 = arith.constant 210 : index
    %76 = vector.load %arg1[%c0_32, %c0_33, %c210] : memref<1x8x664xf32, #tpu.memory_space<vmem>>, vector<1x8x256xf32>
    %77 = vector.shape_cast %76 : vector<1x8x256xf32> to vector<8x256xf32>
    %c6_i32_34 = arith.constant 6 : i32
    %78 = vector.broadcast %c6_i32_34 : i32 to vector<1x256xi32>
    %79 = arith.addi %18, %78 : vector<1x256xi32>
    %c0_i32_35 = arith.constant 0 : i32
    %80 = vector.broadcast %c0_i32_35 : i32 to vector<1x256xi32>
    %81 = arith.cmpi sge, %79, %80 : vector<1x256xi32>
    %c6_i32_36 = arith.constant 6 : i32
    %82 = vector.broadcast %c6_i32_36 : i32 to vector<1x256xi32>
    %83 = arith.addi %18, %82 : vector<1x256xi32>
    %c16_i32_37 = arith.constant 16 : i32
    %84 = vector.broadcast %c16_i32_37 : i32 to vector<1x256xi32>
    %85 = arith.cmpi slt, %83, %84 : vector<1x256xi32>
    %86 = arith.andi %81, %85 : vector<1x256xi1>
    %cst_38 = arith.constant 0.000000e+00 : f32
    %87 = vector.shape_cast %86 : vector<1x256xi1> to vector<1x256xi1>
    %88 = vector.broadcast %87 : vector<1x256xi1> to vector<8x256xi1>
    %89 = vector.broadcast %cst_38 : f32 to vector<8x256xf32>
    %90 = arith.select %88, %77, %89 : vector<8x256xi1>, vector<8x256xf32>
    %c0_39 = arith.constant 0 : index
    %c0_40 = arith.constant 0 : index
    %c294 = arith.constant 294 : index
    %91 = vector.load %arg1[%c0_39, %c0_40, %c294] : memref<1x8x664xf32, #tpu.memory_space<vmem>>, vector<1x8x256xf32>
    %92 = vector.shape_cast %91 : vector<1x8x256xf32> to vector<8x256xf32>
    %c-6_i32_41 = arith.constant -6 : i32
    %93 = vector.broadcast %c-6_i32_41 : i32 to vector<1x256xi32>
    %94 = arith.addi %18, %93 : vector<1x256xi32>
    %c0_i32_42 = arith.constant 0 : i32
    %95 = vector.broadcast %c0_i32_42 : i32 to vector<1x256xi32>
    %96 = arith.cmpi sge, %94, %95 : vector<1x256xi32>
    %c-6_i32_43 = arith.constant -6 : i32
    %97 = vector.broadcast %c-6_i32_43 : i32 to vector<1x256xi32>
    %98 = arith.addi %18, %97 : vector<1x256xi32>
    %c16_i32_44 = arith.constant 16 : i32
    %99 = vector.broadcast %c16_i32_44 : i32 to vector<1x256xi32>
    %100 = arith.cmpi slt, %98, %99 : vector<1x256xi32>
    %101 = arith.andi %96, %100 : vector<1x256xi1>
    %cst_45 = arith.constant 0.000000e+00 : f32
    %102 = vector.shape_cast %101 : vector<1x256xi1> to vector<1x256xi1>
    %103 = vector.broadcast %102 : vector<1x256xi1> to vector<8x256xi1>
    %104 = vector.broadcast %cst_45 : f32 to vector<8x256xf32>
    %105 = arith.select %103, %92, %104 : vector<8x256xi1>, vector<8x256xf32>
    %c0_46 = arith.constant 0 : index
    %c0_47 = arith.constant 0 : index
    %c300 = arith.constant 300 : index
    %106 = vector.load %arg1[%c0_46, %c0_47, %c300] : memref<1x8x664xf32, #tpu.memory_space<vmem>>, vector<1x8x256xf32>
    %107 = vector.shape_cast %106 : vector<1x8x256xf32> to vector<8x256xf32>
    %c0_48 = arith.constant 0 : index
    %c0_49 = arith.constant 0 : index
    %c306 = arith.constant 306 : index
    %108 = vector.load %arg1[%c0_48, %c0_49, %c306] : memref<1x8x664xf32, #tpu.memory_space<vmem>>, vector<1x8x256xf32>
    %109 = vector.shape_cast %108 : vector<1x8x256xf32> to vector<8x256xf32>
    %c6_i32_50 = arith.constant 6 : i32
    %110 = vector.broadcast %c6_i32_50 : i32 to vector<1x256xi32>
    %111 = arith.addi %18, %110 : vector<1x256xi32>
    %c0_i32_51 = arith.constant 0 : i32
    %112 = vector.broadcast %c0_i32_51 : i32 to vector<1x256xi32>
    %113 = arith.cmpi sge, %111, %112 : vector<1x256xi32>
    %c6_i32_52 = arith.constant 6 : i32
    %114 = vector.broadcast %c6_i32_52 : i32 to vector<1x256xi32>
    %115 = arith.addi %18, %114 : vector<1x256xi32>
    %c16_i32_53 = arith.constant 16 : i32
    %116 = vector.broadcast %c16_i32_53 : i32 to vector<1x256xi32>
    %117 = arith.cmpi slt, %115, %116 : vector<1x256xi32>
    %118 = arith.andi %113, %117 : vector<1x256xi1>
    %cst_54 = arith.constant 0.000000e+00 : f32
    %119 = vector.shape_cast %118 : vector<1x256xi1> to vector<1x256xi1>
    %120 = vector.broadcast %119 : vector<1x256xi1> to vector<8x256xi1>
    %121 = vector.broadcast %cst_54 : f32 to vector<8x256xf32>
    %122 = arith.select %120, %109, %121 : vector<8x256xi1>, vector<8x256xf32>
    %123 = tpu.concatenate %43, %45, %60, %75, %1, %90, %105, %107, %122 in 0 : vector<8x256xf32>, vector<8x256xf32>, vector<8x256xf32>, vector<8x256xf32>, vector<8x256xf32>, vector<8x256xf32>, vector<8x256xf32>, vector<8x256xf32>, vector<8x256xf32> -> vector<72x256xf32>
    %c0_55 = arith.constant 0 : index
    %c0_56 = arith.constant 0 : index
    %124 = vector.load %arg4[%c0_55, %c0_56] : memref<8x72xf32, #tpu.memory_space<vmem>>, vector<8x72xf32>
    %cst_57 = arith.constant dense<0.000000e+00> : vector<8x256xf32>
    %125 = tpu.matmul %124, %123, %cst_57 {dimension_numbers = #tpu.dot_dimension_numbers<[1], [0], [0], [1], [0, 0, 1, 1], [], []>} : vector<8x72xf32>, vector<72x256xf32>, vector<8x256xf32> -> vector<8x256xf32>
    %c0_58 = arith.constant 0 : index
    %c0_59 = arith.constant 0 : index
    %c0_60 = arith.constant 0 : index
    %126 = vector.load %arg1[%c0_58, %c0_59, %c0_60] : memref<1x8x664xf32, #tpu.memory_space<vmem>>, vector<1x8x256xf32>
    %127 = vector.shape_cast %126 : vector<1x8x256xf32> to vector<8x256xf32>
    %c-12_i32 = arith.constant -12 : i32
    %128 = vector.broadcast %c-12_i32 : i32 to vector<1x256xi32>
    %129 = arith.addi %18, %128 : vector<1x256xi32>
    %c0_i32_61 = arith.constant 0 : i32
    %130 = vector.broadcast %c0_i32_61 : i32 to vector<1x256xi32>
    %131 = arith.cmpi sge, %129, %130 : vector<1x256xi32>
    %c-12_i32_62 = arith.constant -12 : i32
    %132 = vector.broadcast %c-12_i32_62 : i32 to vector<1x256xi32>
    %133 = arith.addi %18, %132 : vector<1x256xi32>
    %c16_i32_63 = arith.constant 16 : i32
    %134 = vector.broadcast %c16_i32_63 : i32 to vector<1x256xi32>
    %135 = arith.cmpi slt, %133, %134 : vector<1x256xi32>
    %136 = arith.andi %131, %135 : vector<1x256xi1>
    %cst_64 = arith.constant 0.000000e+00 : f32
    %137 = vector.shape_cast %136 : vector<1x256xi1> to vector<1x256xi1>
    %138 = vector.broadcast %137 : vector<1x256xi1> to vector<8x256xi1>
    %139 = vector.broadcast %cst_64 : f32 to vector<8x256xf32>
    %140 = arith.select %138, %127, %139 : vector<8x256xi1>, vector<8x256xf32>
    %c0_65 = arith.constant 0 : index
    %c0_66 = arith.constant 0 : index
    %c12 = arith.constant 12 : index
    %141 = vector.load %arg1[%c0_65, %c0_66, %c12] : memref<1x8x664xf32, #tpu.memory_space<vmem>>, vector<1x8x256xf32>
    %142 = vector.shape_cast %141 : vector<1x8x256xf32> to vector<8x256xf32>
    %c0_67 = arith.constant 0 : index
    %c0_68 = arith.constant 0 : index
    %c24 = arith.constant 24 : index
    %143 = vector.load %arg1[%c0_67, %c0_68, %c24] : memref<1x8x664xf32, #tpu.memory_space<vmem>>, vector<1x8x256xf32>
    %144 = vector.shape_cast %143 : vector<1x8x256xf32> to vector<8x256xf32>
    %c12_i32 = arith.constant 12 : i32
    %145 = vector.broadcast %c12_i32 : i32 to vector<1x256xi32>
    %146 = arith.addi %18, %145 : vector<1x256xi32>
    %c0_i32_69 = arith.constant 0 : i32
    %147 = vector.broadcast %c0_i32_69 : i32 to vector<1x256xi32>
    %148 = arith.cmpi sge, %146, %147 : vector<1x256xi32>
    %c12_i32_70 = arith.constant 12 : i32
    %149 = vector.broadcast %c12_i32_70 : i32 to vector<1x256xi32>
    %150 = arith.addi %18, %149 : vector<1x256xi32>
    %c16_i32_71 = arith.constant 16 : i32
    %151 = vector.broadcast %c16_i32_71 : i32 to vector<1x256xi32>
    %152 = arith.cmpi slt, %150, %151 : vector<1x256xi32>
    %153 = arith.andi %148, %152 : vector<1x256xi1>
    %cst_72 = arith.constant 0.000000e+00 : f32
    %154 = vector.shape_cast %153 : vector<1x256xi1> to vector<1x256xi1>
    %155 = vector.broadcast %154 : vector<1x256xi1> to vector<8x256xi1>
    %156 = vector.broadcast %cst_72 : f32 to vector<8x256xf32>
    %157 = arith.select %155, %144, %156 : vector<8x256xi1>, vector<8x256xf32>
    %c0_73 = arith.constant 0 : index
    %c0_74 = arith.constant 0 : index
    %c192 = arith.constant 192 : index
    %158 = vector.load %arg1[%c0_73, %c0_74, %c192] : memref<1x8x664xf32, #tpu.memory_space<vmem>>, vector<1x8x256xf32>
    %159 = vector.shape_cast %158 : vector<1x8x256xf32> to vector<8x256xf32>
    %c-12_i32_75 = arith.constant -12 : i32
    %160 = vector.broadcast %c-12_i32_75 : i32 to vector<1x256xi32>
    %161 = arith.addi %18, %160 : vector<1x256xi32>
    %c0_i32_76 = arith.constant 0 : i32
    %162 = vector.broadcast %c0_i32_76 : i32 to vector<1x256xi32>
    %163 = arith.cmpi sge, %161, %162 : vector<1x256xi32>
    %c-12_i32_77 = arith.constant -12 : i32
    %164 = vector.broadcast %c-12_i32_77 : i32 to vector<1x256xi32>
    %165 = arith.addi %18, %164 : vector<1x256xi32>
    %c16_i32_78 = arith.constant 16 : i32
    %166 = vector.broadcast %c16_i32_78 : i32 to vector<1x256xi32>
    %167 = arith.cmpi slt, %165, %166 : vector<1x256xi32>
    %168 = arith.andi %163, %167 : vector<1x256xi1>
    %cst_79 = arith.constant 0.000000e+00 : f32
    %169 = vector.shape_cast %168 : vector<1x256xi1> to vector<1x256xi1>
    %170 = vector.broadcast %169 : vector<1x256xi1> to vector<8x256xi1>
    %171 = vector.broadcast %cst_79 : f32 to vector<8x256xf32>
    %172 = arith.select %170, %159, %171 : vector<8x256xi1>, vector<8x256xf32>
    %c0_80 = arith.constant 0 : index
    %c0_81 = arith.constant 0 : index
    %c216 = arith.constant 216 : index
    %173 = vector.load %arg1[%c0_80, %c0_81, %c216] : memref<1x8x664xf32, #tpu.memory_space<vmem>>, vector<1x8x256xf32>
    %174 = vector.shape_cast %173 : vector<1x8x256xf32> to vector<8x256xf32>
    %c12_i32_82 = arith.constant 12 : i32
    %175 = vector.broadcast %c12_i32_82 : i32 to vector<1x256xi32>
    %176 = arith.addi %18, %175 : vector<1x256xi32>
    %c0_i32_83 = arith.constant 0 : i32
    %177 = vector.broadcast %c0_i32_83 : i32 to vector<1x256xi32>
    %178 = arith.cmpi sge, %176, %177 : vector<1x256xi32>
    %c12_i32_84 = arith.constant 12 : i32
    %179 = vector.broadcast %c12_i32_84 : i32 to vector<1x256xi32>
    %180 = arith.addi %18, %179 : vector<1x256xi32>
    %c16_i32_85 = arith.constant 16 : i32
    %181 = vector.broadcast %c16_i32_85 : i32 to vector<1x256xi32>
    %182 = arith.cmpi slt, %180, %181 : vector<1x256xi32>
    %183 = arith.andi %178, %182 : vector<1x256xi1>
    %cst_86 = arith.constant 0.000000e+00 : f32
    %184 = vector.shape_cast %183 : vector<1x256xi1> to vector<1x256xi1>
    %185 = vector.broadcast %184 : vector<1x256xi1> to vector<8x256xi1>
    %186 = vector.broadcast %cst_86 : f32 to vector<8x256xf32>
    %187 = arith.select %185, %174, %186 : vector<8x256xi1>, vector<8x256xf32>
    %c0_87 = arith.constant 0 : index
    %c0_88 = arith.constant 0 : index
    %c384 = arith.constant 384 : index
    %188 = vector.load %arg1[%c0_87, %c0_88, %c384] : memref<1x8x664xf32, #tpu.memory_space<vmem>>, vector<1x8x256xf32>
    %189 = vector.shape_cast %188 : vector<1x8x256xf32> to vector<8x256xf32>
    %c-12_i32_89 = arith.constant -12 : i32
    %190 = vector.broadcast %c-12_i32_89 : i32 to vector<1x256xi32>
    %191 = arith.addi %18, %190 : vector<1x256xi32>
    %c0_i32_90 = arith.constant 0 : i32
    %192 = vector.broadcast %c0_i32_90 : i32 to vector<1x256xi32>
    %193 = arith.cmpi sge, %191, %192 : vector<1x256xi32>
    %c-12_i32_91 = arith.constant -12 : i32
    %194 = vector.broadcast %c-12_i32_91 : i32 to vector<1x256xi32>
    %195 = arith.addi %18, %194 : vector<1x256xi32>
    %c16_i32_92 = arith.constant 16 : i32
    %196 = vector.broadcast %c16_i32_92 : i32 to vector<1x256xi32>
    %197 = arith.cmpi slt, %195, %196 : vector<1x256xi32>
    %198 = arith.andi %193, %197 : vector<1x256xi1>
    %cst_93 = arith.constant 0.000000e+00 : f32
    %199 = vector.shape_cast %198 : vector<1x256xi1> to vector<1x256xi1>
    %200 = vector.broadcast %199 : vector<1x256xi1> to vector<8x256xi1>
    %201 = vector.broadcast %cst_93 : f32 to vector<8x256xf32>
    %202 = arith.select %200, %189, %201 : vector<8x256xi1>, vector<8x256xf32>
    %c0_94 = arith.constant 0 : index
    %c0_95 = arith.constant 0 : index
    %c396 = arith.constant 396 : index
    %203 = vector.load %arg1[%c0_94, %c0_95, %c396] : memref<1x8x664xf32, #tpu.memory_space<vmem>>, vector<1x8x256xf32>
    %204 = vector.shape_cast %203 : vector<1x8x256xf32> to vector<8x256xf32>
    %c0_96 = arith.constant 0 : index
    %c0_97 = arith.constant 0 : index
    %c408 = arith.constant 408 : index
    %205 = vector.load %arg1[%c0_96, %c0_97, %c408] : memref<1x8x664xf32, #tpu.memory_space<vmem>>, vector<1x8x256xf32>
    %206 = vector.shape_cast %205 : vector<1x8x256xf32> to vector<8x256xf32>
    %c12_i32_98 = arith.constant 12 : i32
    %207 = vector.broadcast %c12_i32_98 : i32 to vector<1x256xi32>
    %208 = arith.addi %18, %207 : vector<1x256xi32>
    %c0_i32_99 = arith.constant 0 : i32
    %209 = vector.broadcast %c0_i32_99 : i32 to vector<1x256xi32>
    %210 = arith.cmpi sge, %208, %209 : vector<1x256xi32>
    %c12_i32_100 = arith.constant 12 : i32
    %211 = vector.broadcast %c12_i32_100 : i32 to vector<1x256xi32>
    %212 = arith.addi %18, %211 : vector<1x256xi32>
    %c16_i32_101 = arith.constant 16 : i32
    %213 = vector.broadcast %c16_i32_101 : i32 to vector<1x256xi32>
    %214 = arith.cmpi slt, %212, %213 : vector<1x256xi32>
    %215 = arith.andi %210, %214 : vector<1x256xi1>
    %cst_102 = arith.constant 0.000000e+00 : f32
    %216 = vector.shape_cast %215 : vector<1x256xi1> to vector<1x256xi1>
    %217 = vector.broadcast %216 : vector<1x256xi1> to vector<8x256xi1>
    %218 = vector.broadcast %cst_102 : f32 to vector<8x256xf32>
    %219 = arith.select %217, %206, %218 : vector<8x256xi1>, vector<8x256xf32>
    %220 = tpu.concatenate %140, %142, %157, %172, %1, %187, %202, %204, %219 in 0 : vector<8x256xf32>, vector<8x256xf32>, vector<8x256xf32>, vector<8x256xf32>, vector<8x256xf32>, vector<8x256xf32>, vector<8x256xf32>, vector<8x256xf32>, vector<8x256xf32> -> vector<72x256xf32>
    %c0_103 = arith.constant 0 : index
    %c0_104 = arith.constant 0 : index
    %221 = vector.load %arg5[%c0_103, %c0_104] : memref<8x72xf32, #tpu.memory_space<vmem>>, vector<8x72xf32>
    %cst_105 = arith.constant dense<0.000000e+00> : vector<8x256xf32>
    %222 = tpu.matmul %221, %220, %cst_105 {dimension_numbers = #tpu.dot_dimension_numbers<[1], [0], [0], [1], [0, 0, 1, 1], [], []>} : vector<8x72xf32>, vector<72x256xf32>, vector<8x256xf32> -> vector<8x256xf32>
    %c0_106 = arith.constant 0 : index
    %c0_107 = arith.constant 0 : index
    %223 = vector.load %arg6[%c0_106, %c0_107] : memref<8x8xf32, #tpu.memory_space<vmem>>, vector<8x8xf32>
    %cst_108 = arith.constant dense<0.000000e+00> : vector<8x256xf32>
    %224 = tpu.matmul %223, %1, %cst_108 {dimension_numbers = #tpu.dot_dimension_numbers<[1], [0], [0], [1], [0, 0, 1, 1], [], []>} : vector<8x8xf32>, vector<8x256xf32>, vector<8x256xf32> -> vector<8x256xf32>
    %225 = tpu.concatenate %26, %28, %125, %222, %224 in 0 : vector<8x256xf32>, vector<8x256xf32>, vector<8x256xf32>, vector<8x256xf32>, vector<8x256xf32> -> vector<40x256xf32>
    %c0_109 = arith.constant 0 : index
    %c0_110 = arith.constant 0 : index
    %226 = vector.load %arg7[%c0_109, %c0_110] : memref<40x1xf32, #tpu.memory_space<vmem>>, vector<40x1xf32>
    %227 = vector.broadcast %226 : vector<40x1xf32> to vector<40x256xf32>
    %228 = arith.addf %225, %227 : vector<40x256xf32>
    %cst_111 = arith.constant 0.000000e+00 : f32
    %229 = vector.broadcast %cst_111 : f32 to vector<40x256xf32>
    %230 = arith.maximumf %228, %229 : vector<40x256xf32>
    %c0_112 = arith.constant 0 : index
    %c0_113 = arith.constant 0 : index
    %c0_114 = arith.constant 0 : index
    %231 = vector.load %arg8[%c0_112, %c0_113, %c0_114] : memref<1x40x256xf32, #tpu.memory_space<vmem>>, vector<1x40x256xf32>
    %232 = vector.shape_cast %231 : vector<1x40x256xf32> to vector<40x256xf32>
    %233 = vector.shape_cast %230 : vector<40x256xf32> to vector<1x40x256xf32>
    tpu.vector_store %arg8[%c0_112, %c0_113, %c0_114], %233 {strides = array<i32>} : memref<1x40x256xf32, #tpu.memory_space<vmem>>, vector<1x40x256xf32>,
    return
  }
  func.func @transform_0(%arg0: i32) -> (i32, i32, i32) {
    %c0_i32 = arith.constant 0 : i32
    %c0_i32_0 = arith.constant 0 : i32
    %c0_i32_1 = arith.constant 0 : i32
    return %arg0, %c0_i32, %c0_i32_0 : i32, i32, i32
  }
  func.func @transform_1(%arg0: i32) -> (i32, i32) {
    %c0_i32 = arith.constant 0 : i32
    %c0_i32_0 = arith.constant 0 : i32
    %c0_i32_1 = arith.constant 0 : i32
    return %c0_i32, %c0_i32_0 : i32, i32
  }
  func.func @transform_2(%arg0: i32) -> (i32, i32) {
    %c0_i32 = arith.constant 0 : i32
    %c0_i32_0 = arith.constant 0 : i32
    %c0_i32_1 = arith.constant 0 : i32
    return %c0_i32, %c0_i32_0 : i32, i32
  }
  func.func @transform_3(%arg0: i32) -> (i32, i32) {
    %c0_i32 = arith.constant 0 : i32
    %c0_i32_0 = arith.constant 0 : i32
    %c0_i32_1 = arith.constant 0 : i32
    return %c0_i32, %c0_i32_0 : i32, i32
  }
  func.func @transform_4(%arg0: i32) -> (i32, i32) {
    %c0_i32 = arith.constant 0 : i32
    %c0_i32_0 = arith.constant 0 : i32
    %c0_i32_1 = arith.constant 0 : i32
    return %c0_i32, %c0_i32_0 : i32, i32
  }
  func.func @transform_5(%arg0: i32) -> (i32, i32) {
    %c0_i32 = arith.constant 0 : i32
    %c0_i32_0 = arith.constant 0 : i32
    %c0_i32_1 = arith.constant 0 : i32
    return %c0_i32, %c0_i32_0 : i32, i32
  }
  func.func @transform_6(%arg0: i32) -> (i32, i32) {
    %c0_i32 = arith.constant 0 : i32
    %c0_i32_0 = arith.constant 0 : i32
    %c0_i32_1 = arith.constant 0 : i32
    return %c0_i32, %c0_i32_0 : i32, i32
  }
  func.func @transform_7(%arg0: i32) -> (i32, i32, i32) {
    %c0_i32 = arith.constant 0 : i32
    %c0_i32_0 = arith.constant 0 : i32
    %c0_i32_1 = arith.constant 0 : i32
    return %arg0, %c0_i32, %c0_i32_0 : i32, i32, i32
  }
}

</mosaic_0001>

<llo_original>
// kernel: aspp_forward.1
$region0: #{aspp_forward.1}
  #allocation0 [shape = 'u32[]', space=smem, size = 0x4, offset = 0x4, fixed_abs, tag = 'smem constant byte address 0x4 - core index']
  #allocation1 [shape = 'u32[144,128]{1,0:T(1,128)}', space=vmem, size = 0x12000, scoped, tag = 'internal scratch']
  %s0 = inlined_call_operand.vmem [shape: f32[2,8,664], index: 0, kind: input, shape index: {}]
  %s1 = inlined_call_operand.vmem [shape: f32[8,8], index: 1, kind: input, shape index: {}]
  %s2 = inlined_call_operand.vmem [shape: f32[8,8], index: 2, kind: input, shape index: {}]
  %s3 = inlined_call_operand.vmem [shape: f32[8,72], index: 3, kind: input, shape index: {}]
  %s4 = inlined_call_operand.vmem [shape: f32[8,72], index: 4, kind: input, shape index: {}]
  %s5 = inlined_call_operand.vmem [shape: f32[8,8], index: 5, kind: input, shape index: {}]
  %s6 = inlined_call_operand.vmem [shape: f32[40,1], index: 6, kind: input, shape index: {}]
  %s7 = inlined_call_operand.vmem [shape: f32[2,40,256], index: 7, kind: output, shape index: {}]
  %s8 = sld [smem:[#allocation0]]
  $region61: #{aspp_forward.1} parent=0
    _
  %s10 = ssub.s32 1, %s8
  %s11 = scalar_select 0, %s10, %s8
  loop: start=0, step=1, limit=4
  $region2: #{aspp_forward.1} parent=0 // loop_pre_header
    _
  $region3: #{aspp_forward.1} parent=0 // loop_header
    %s13 = sphi 0, %s17
    %p14 = scmp.ge.s32.totalorder %s13, 4
    %s23 = sphi 0, %s25
    %s26 = sphi 0, %s23
    %s27 = sphi 0, %s26
    %s43 = sphi 0, %s27
    %s47 = sphi 0, %s47
    %s49 = sphi 0, %s47
    %s50 = sphi 0, %s49
    %s64 = sphi 0, %s50
    %s68 = sphi 0, %s68
    %s70 = sphi 0, %s68
    %s71 = sphi 0, %s70
    %s85 = sphi 0, %s71
    %s89 = sphi 0, %s89
    %s91 = sphi 0, %s89
    %s92 = sphi 0, %s91
    %s106 = sphi 0, %s92
    %s110 = sphi 0, %s110
    %s112 = sphi 0, %s110
    %s113 = sphi 0, %s112
    %s127 = sphi 0, %s113
    %s131 = sphi 0, %s131
    %s133 = sphi 0, %s131
    %s134 = sphi 0, %s133
    %s148 = sphi 0, %s134
    %s152 = sphi 0, %s152
    %s154 = sphi 0, %s152
    %s155 = sphi 0, %s154
    %s169 = sphi 0, %s155
    %s175 = sphi 0, %s177
    %s178 = sphi 0, %s175
    %s179 = sphi 0, %s178
    %s195 = sphi 0, %s179
  $region4: #{aspp_forward.1} parent=0 // loop_header_branch
    %16 = sbr.rel (%p14) target = $region8
  $region5: #{aspp_forward.1} parent=0 // loop_body
    %s18 = ssub.s32 %s13, 1
    %s19 = ssub.s32 %s13, 2
    %s20 = sadd.s32 %s13, 1
    %s21 = ssub.s32 %s13, %s20
    %p22 = scmp.eq.s32.totalorder %s21, 0
    %s24 = sadd.s32 %s23, 1
    %s25 = scalar_select %p22, %s23, %s24
    %p28 = pneg %p22
    %p29 = scmp.eq.s32.totalorder %s13, 1
    %p30 = por %p28, %p29
    %p31 = scmp.ne.s32.totalorder %s23, %s26
    %p32 = scmp.eq.s32.totalorder %s13, 0
    %p33 = por %p31, %p32
    %p34 = scmp.ne.s32.totalorder %s23, %s26
    %p35 = scmp.eq.s32.totalorder %s18, 1
    %p36 = por %p34, %p35
    %p37 = scmp.ne.s32.totalorder %s26, %s27
    %p38 = scmp.eq.s32.totalorder %s18, 0
    %p39 = por %p37, %p38
    %p40 = scmp.ne.s32.totalorder %s26, %s27
    %p41 = scmp.eq.s32.totalorder %s19, 1
    %p42 = por %p40, %p41
    %p44 = scmp.ne.s32.totalorder %s27, %s43
    %p45 = scmp.eq.s32.totalorder %s19, 0
    %p46 = por %p44, %p45
    %s48 = sadd.s32 %s47, 1
    %p51 = scmp.eq.s32.totalorder %s13, 1
    %p52 = scmp.ne.s32.totalorder %s47, %s49
    %p53 = scmp.eq.s32.totalorder %s13, 0
    %p54 = por %p52, %p53
    %p55 = scmp.ne.s32.totalorder %s47, %s49
    %p56 = scmp.eq.s32.totalorder %s18, 1
    %p57 = por %p55, %p56
    %p58 = scmp.ne.s32.totalorder %s49, %s50
    %p59 = scmp.eq.s32.totalorder %s18, 0
    %p60 = por %p58, %p59
    %p61 = scmp.ne.s32.totalorder %s49, %s50
    %p62 = scmp.eq.s32.totalorder %s19, 1
    %p63 = por %p61, %p62
    %p65 = scmp.ne.s32.totalorder %s50, %s64
    %p66 = scmp.eq.s32.totalorder %s19, 0
    %p67 = por %p65, %p66
    %s69 = sadd.s32 %s68, 1
    %p72 = scmp.eq.s32.totalorder %s13, 1
    %p73 = scmp.ne.s32.totalorder %s68, %s70
    %p74 = scmp.eq.s32.totalorder %s13, 0
    %p75 = por %p73, %p74
    %p76 = scmp.ne.s32.totalorder %s68, %s70
    %p77 = scmp.eq.s32.totalorder %s18, 1
    %p78 = por %p76, %p77
    %p79 = scmp.ne.s32.totalorder %s70, %s71
    %p80 = scmp.eq.s32.totalorder %s18, 0
    %p81 = por %p79, %p80
    %p82 = scmp.ne.s32.totalorder %s70, %s71
    %p83 = scmp.eq.s32.totalorder %s19, 1
    %p84 = por %p82, %p83
    %p86 = scmp.ne.s32.totalorder %s71, %s85
    %p87 = scmp.eq.s32.totalorder %s19, 0
    %p88 = por %p86, %p87
    %s90 = sadd.s32 %s89, 1
    %p93 = scmp.eq.s32.totalorder %s13, 1
    %p94 = scmp.ne.s32.totalorder %s89, %s91
    %p95 = scmp.eq.s32.totalorder %s13, 0
    %p96 = por %p94, %p95
    %p97 = scmp.ne.s32.totalorder %s89, %s91
    %p98 = scmp.eq.s32.totalorder %s18, 1
    %p99 = por %p97, %p98
    %p100 = scmp.ne.s32.totalorder %s91, %s92
    %p101 = scmp.eq.s32.totalorder %s18, 0
    %p102 = por %p100, %p101
    %p103 = scmp.ne.s32.totalorder %s91, %s92
    %p104 = scmp.eq.s32.totalorder %s19, 1
    %p105 = por %p103, %p104
    %p107 = scmp.ne.s32.totalorder %s92, %s106
    %p108 = scmp.eq.s32.totalorder %s19, 0
    %p109 = por %p107, %p108
    %s111 = sadd.s32 %s110, 1
    %p114 = scmp.eq.s32.totalorder %s13, 1
    %p115 = scmp.ne.s32.totalorder %s110, %s112
    %p116 = scmp.eq.s32.totalorder %s13, 0
    %p117 = por %p115, %p116
    %p118 = scmp.ne.s32.totalorder %s110, %s112
    %p119 = scmp.eq.s32.totalorder %s18, 1
    %p120 = por %p118, %p119
    %p121 = scmp.ne.s32.totalorder %s112, %s113
    %p122 = scmp.eq.s32.totalorder %s18, 0
    %p123 = por %p121, %p122
    %p124 = scmp.ne.s32.totalorder %s112, %s113
    %p125 = scmp.eq.s32.totalorder %s19, 1
    %p126 = por %p124, %p125
    %p128 = scmp.ne.s32.totalorder %s113, %s127
    %p129 = scmp.eq.s32.totalorder %s19, 0
    %p130 = por %p128, %p129
    %s132 = sadd.s32 %s131, 1
    %p135 = scmp.eq.s32.totalorder %s13, 1
    %p136 = scmp.ne.s32.totalorder %s131, %s133
    %p137 = scmp.eq.s32.totalorder %s13, 0
    %p138 = por %p136, %p137
    %p139 = scmp.ne.s32.totalorder %s131, %s133
    %p140 = scmp.eq.s32.totalorder %s18, 1
    %p141 = por %p139, %p140
    %p142 = scmp.ne.s32.totalorder %s133, %s134
    %p143 = scmp.eq.s32.totalorder %s18, 0
    %p144 = por %p142, %p143
    %p145 = scmp.ne.s32.totalorder %s133, %s134
    %p146 = scmp.eq.s32.totalorder %s19, 1
    %p147 = por %p145, %p146
    %p149 = scmp.ne.s32.totalorder %s134, %s148
    %p150 = scmp.eq.s32.totalorder %s19, 0
    %p151 = por %p149, %p150
    %s153 = sadd.s32 %s152, 1
    %p156 = scmp.eq.s32.totalorder %s13, 1
    %p157 = scmp.ne.s32.totalorder %s152, %s154
    %p158 = scmp.eq.s32.totalorder %s13, 0
    %p159 = por %p157, %p158
    %p160 = scmp.ne.s32.totalorder %s152, %s154
    %p161 = scmp.eq.s32.totalorder %s18, 1
    %p162 = por %p160, %p161
    %p163 = scmp.ne.s32.totalorder %s154, %s155
    %p164 = scmp.eq.s32.totalorder %s18, 0
    %p165 = por %p163, %p164
    %p166 = scmp.ne.s32.totalorder %s154, %s155
    %p167 = scmp.eq.s32.totalorder %s19, 1
    %p168 = por %p166, %p167
    %p170 = scmp.ne.s32.totalorder %s155, %s169
    %p171 = scmp.eq.s32.totalorder %s19, 0
    %p172 = por %p170, %p171
    %s173 = ssub.s32 %s13, %s20
    %p174 = scmp.eq.s32.totalorder %s173, 0
    %s176 = sadd.s32 %s175, 1
    %s177 = scalar_select %p174, %s175, %s176
    %p180 = pneg %p174
    %p181 = scmp.eq.s32.totalorder %s13, 1
    %p182 = por %p180, %p181
    %p183 = scmp.ne.s32.totalorder %s175, %s178
    %p184 = scmp.eq.s32.totalorder %s13, 0
    %p185 = por %p183, %p184
    %p186 = scmp.ne.s32.totalorder %s175, %s178
    %p187 = scmp.eq.s32.totalorder %s18, 1
    %p188 = por %p186, %p187
    %p189 = scmp.ne.s32.totalorder %s178, %s179
    %p190 = scmp.eq.s32.totalorder %s18, 0
    %p191 = por %p189, %p190
    %p192 = scmp.ne.s32.totalorder %s178, %s179
    %p193 = scmp.eq.s32.totalorder %s19, 1
    %p194 = por %p192, %p193
    %p196 = scmp.ne.s32.totalorder %s179, %s195
    %p197 = scmp.eq.s32.totalorder %s19, 0
    %p198 = por %p196, %p197
    %p199 = scmp.le.s32.totalorder 1, %s13
    %p200 = scmp.lt.s32.totalorder %s13, 3
    %p201 = pnand %p199, %p200
    %p202 = pneg %p201
    // Predicated region
    $region9: #{aspp_forward.1} parent=5 // pred_check
      _
    $region10: #{aspp_forward.1} parent=5 // pred_check_branch
      %204 = sbr.rel (%p201) target = $region12
    $region11: #{aspp_forward.1} parent=5 // pred_region
      %s205 = ssub.s32 %s13, 1
      // Predicated region
      $region13: #{aspp_forward.1} parent=11 // pred_check
        %p206 = pneg %p60
      $region14: #{aspp_forward.1} parent=11 // pred_check_branch
        %208 = sbr.rel (%p206) target = $region16
      $region15: #{aspp_forward.1} parent=11 // pred_region
        _
      $region16: #{aspp_forward.1} parent=11 // pred_fallthru
        _
      // Predicated region
      $region17: #{aspp_forward.1} parent=11 // pred_check
        %p209 = pneg %p81
      $region18: #{aspp_forward.1} parent=11 // pred_check_branch
        %211 = sbr.rel (%p209) target = $region20
      $region19: #{aspp_forward.1} parent=11 // pred_region
        _
      $region20: #{aspp_forward.1} parent=11 // pred_fallthru
        _
      // Predicated region
      $region21: #{aspp_forward.1} parent=11 // pred_check
        %p212 = pneg %p102
      $region22: #{aspp_forward.1} parent=11 // pred_check_branch
        %214 = sbr.rel (%p212) target = $region24
      $region23: #{aspp_forward.1} parent=11 // pred_region
        _
      $region24: #{aspp_forward.1} parent=11 // pred_fallthru
        _
      // Predicated region
      $region25: #{aspp_forward.1} parent=11 // pred_check
        %p215 = pneg %p123
      $region26: #{aspp_forward.1} parent=11 // pred_check_branch
        %217 = sbr.rel (%p215) target = $region28
      $region27: #{aspp_forward.1} parent=11 // pred_region
        _
      $region28: #{aspp_forward.1} parent=11 // pred_fallthru
        _
      // Predicated region
      $region29: #{aspp_forward.1} parent=11 // pred_check
        %p218 = pneg %p144
      $region30: #{aspp_forward.1} parent=11 // pred_check_branch
        %220 = sbr.rel (%p218) target = $region32
      $region31: #{aspp_forward.1} parent=11 // pred_region
        _
      $region32: #{aspp_forward.1} parent=11 // pred_fallthru
        _
      // Predicated region
      $region33: #{aspp_forward.1} parent=11 // pred_check
        %p221 = pneg %p165
      $region34: #{aspp_forward.1} parent=11 // pred_check_branch
        %223 = sbr.rel (%p221) target = $region36
      $region35: #{aspp_forward.1} parent=11 // pred_region
        _
      $region36: #{aspp_forward.1} parent=11 // pred_fallthru
        _
    $region12: #{aspp_forward.1} parent=5 // pred_fallthru
      _
    %p224 = scmp.lt.s32.totalorder %s13, 2
    // Predicated region
    $region37: #{aspp_forward.1} parent=5 // pred_check
      %p225 = pneg %p224
    $region38: #{aspp_forward.1} parent=5 // pred_check_branch
      %227 = sbr.rel (%p225) target = $region40
    $region39: #{aspp_forward.1} parent=5 // pred_region
      // Predicated region
      $region41: #{aspp_forward.1} parent=39 // pred_check
        %p228 = pneg %p33
      $region42: #{aspp_forward.1} parent=39 // pred_check_branch
        %230 = sbr.rel (%p228) target = $region44
      $region43: #{aspp_forward.1} parent=39 // pred_region
        %p231 = scmp.lt.s32.totalorder %s13, 1
        %s232 = scalar_select %p231, %s13, 1
        %s233 = smul.addr %s232, 6
        %s234 = smul.addr %s233, 8
        %s235 = scalar_lea.vmem %s0, %s234
      $region44: #{aspp_forward.1} parent=39 // pred_fallthru
        _
    $region40: #{aspp_forward.1} parent=5 // pred_fallthru
      _
    %p236 = scmp.le.s32.totalorder 1, %s13
    %p237 = scmp.lt.s32.totalorder %s13, 3
    %p238 = pnand %p236, %p237
    %p239 = pneg %p238
    // Predicated region
    $region45: #{aspp_forward.1} parent=5 // pred_check
      _
    $region46: #{aspp_forward.1} parent=5 // pred_check_branch
      %241 = sbr.rel (%p238) target = $region48
    $region47: #{aspp_forward.1} parent=5 // pred_region
      %s242 = ssub.s32 %s13, 1
      %p243 = scmp.lt.s32.totalorder %s18, 1
      %s244 = scalar_select %p243, %s18, 1
      %s245 = smul.addr %s244, 6
      %s246 = smul.addr %s245, 8
      %s247 = scalar_lea.vmem %s0, %s246
      %p248 = pneg %p39
      %p249 = pneg %p36
      %p250 = pneg %p60
      %p251 = pneg %p57
      %p252 = pneg %p81
      %p253 = pneg %p78
      %p254 = pneg %p102
      %p255 = pneg %p99
      %p256 = pneg %p123
      %p257 = pneg %p120
      %p258 = pneg %p144
      %p259 = pneg %p141
      %p260 = pneg %p165
      %p261 = pneg %p162
      %p262 = pneg %p191
      %p263 = pneg %p188
      %p264 = scmp.lt.s32.totalorder %s18, 1
      %s265 = scalar_select %p264, %s18, 1
      %s266 = smul.addr %s265, 10
      %s267 = smul.addr %s266, 8
      %s268 = scalar_lea.vmem %s7, %s267
      %p269 = scmp.lt.s32.totalorder %s18, 1
      %s270 = scalar_select %p269, %s18, 1
      %s271 = smul.addr %s270, 6
      %s272 = smul.addr %s271, 8
      %s273 = scalar_lea.vmem %s0, %s272
      %p274 = scmp.lt.s32.totalorder %s18, 1
      %s275 = scalar_select %p274, %s18, 1
      %s276 = smul.addr %s275, 10
      %s277 = smul.addr %s276, 8
      %s278 = scalar_lea.vmem %s7, %s277
      %v279 = vld [vmem:[%s273 + $0x8] sm:$0xff]
      %v280 = vld [vmem:[%s273 + $0x10] sm:$0xff]
      %v281 = vld [vmem:[%s273 + $0x18] sm:$0xff]
      %v282 = vlaneseq
      %v283 = vand.u32 %v282, 127
      %v284 = vadd.s32 %v283, 128
      %vm285 = vcmp.lt.s32.totalorder %v283, 0
      %v286 = vsub.s32 0, %v283
      %v287 = vsel %vm285, %v286, %v283
      %v288 = vshrl.u32 %v287, 4
      %v289 = vand.u32 %v287, 15
      %v290 = vsub.s32 0, %v289
      %v291 = vsel %vm285, %v290, %v289
      %vm292 = vcmp.lt.s32.totalorder %v284, 0
      %v293 = vsub.s32 0, %v284
      %v294 = vsel %vm292, %v293, %v284
      %v295 = vshrl.u32 %v294, 4
      %v296 = vand.u32 %v294, 15
      %v297 = vsub.s32 0, %v296
      %v298 = vsel %vm292, %v297, %v296
      %vm299 = vcmp.ne.s32.totalorder %v291, 0
      %vm300 = vcmp.ne.s32.totalorder %v298, 0
      %vm301 = vcmp.lt.s32.totalorder %v291, 0
      %vm302 = vcmp.lt.s32.totalorder %v298, 0
      %vm303 = vmand %vm301, %vm299
      %vm304 = vmand %vm302, %vm300
      %v305 = vadd.s32 %v291, 16
      %v306 = vadd.s32 %v298, 16
      %v307 = vsel %vm303, %v305, %v291
      %v308 = vsel %vm304, %v306, %v298
      %312 = vrot.lane.b32.xlu0 %v279, 52
      %v313 = vpop.permute.xlu0 %312
      %314 = vrot.lane.b32.xlu0 %v280, 52
      %v315 = vpop.permute.xlu0 %314
      %316 = vrot.lane.b32.xlu0 %v281, 52
      %v317 = vpop.permute.xlu0 %316
      %vm318 = vcmask 424960
      %v319 = vsel %vm318, %v313, %v315
      %v320 = vsel %vm318, %v315, %v317
      %v323 = vadd.f32 %v319, %v320
      %324 = vadd.xlane.f32.xlu0 %v323
      %v325 = vpop.xlane.xlu0 %324
      %v326 = vrcp.pop 256.0
      %v327 = vmul.f32 %v325, %v326
      %v328 = vld [vmem:[%s1] sm:$0xff]
      %vm329 = vcmask 64512
      %v331 = vsel %vm329, %v328, 0
      %333 = vmatprep.subr.mxu0 0.0
      %334 = vmatpush1.msra.mxu0 %v327
      %335 = vmatprep.subr.mxu0 0.0
      %336 = vmatpush1.msra.mxu0 0.0
      %337 = vmatprep.subr.mxu0 0.0
      %338 = vmatpush1.msra.mxu0 0.0
      %339 = vmatprep.subr.mxu0 0.0
      %340 = vmatpush1.msra.mxu0 0.0
      %341 = vmatprep.subr.mxu0 0.0
      %342 = vmatpush1.msra.mxu0 0.0
      %343 = vmatprep.subr.mxu0 0.0
      %344 = vmatpush1.msra.mxu0 0.0
      %345 = vmatprep.subr.mxu0 0.0
      %346 = vmatpush1.msra.mxu0 0.0
      %347 = vmatprep.subr.mxu0 0.0
      %348 = vmatpush1.msra.mxu0 0.0
      %349 = vmatprep.subr.mxu0 0.0
      %350 = vmatpush1.msra.mxu0 0.0
      %351 = vmatprep.subr.mxu0 0.0
      %352 = vmatpush1.msra.mxu0 0.0
      %353 = vmatprep.subr.mxu0 0.0
      %354 = vmatpush1.msra.mxu0 0.0
      %355 = vmatprep.subr.mxu0 0.0
      %356 = vmatpush1.msra.mxu0 0.0
      %357 = vmatprep.subr.mxu0 0.0
      %358 = vmatpush1.msra.mxu0 0.0
      %359 = vmatprep.subr.mxu0 0.0
      %360 = vmatpush1.msra.mxu0 0.0
      %361 = vmatprep.subr.mxu0 0.0
      %362 = vmatpush1.msra.mxu0 0.0
      %363 = vmatprep.subr.mxu0 0.0
      %364 = vmatpush1.msra.mxu0 0.0
      %365 = vmatprep.subr.mxu0 0.0
      %366 = vmatpush1.msra.mxu0 0.0
      %367 = vmatprep.subr.mxu0 0.0
      %368 = vmatpush1.msra.mxu0 0.0
      %369 = vmatprep.subr.mxu0 0.0
      %370 = vmatpush1.msra.mxu0 0.0
      %371 = vmatprep.subr.mxu0 0.0
      %372 = vmatpush1.msra.mxu0 0.0
      %373 = vmatprep.subr.mxu0 0.0
      %374 = vmatpush1.msra.mxu0 0.0
      %375 = vmatprep.subr.mxu0 0.0
      %376 = vmatpush1.msra.mxu0 0.0
      %377 = vmatprep.subr.mxu0 0.0
      %378 = vmatpush1.msra.mxu0 0.0
      %379 = vmatprep.subr.mxu0 0.0
      %380 = vmatpush1.msra.mxu0 0.0
      %381 = vmatprep.subr.mxu0 0.0
      %382 = vmatpush1.msra.mxu0 0.0
      %383 = vmatprep.subr.mxu0 0.0
      %384 = vmatpush1.msra.mxu0 0.0
      %385 = vmatprep.subr.mxu0 0.0
      %386 = vmatpush1.msra.mxu0 0.0
      %387 = vmatprep.subr.mxu0 0.0
      %388 = vmatpush1.msra.mxu0 0.0
      %389 = vmatprep.subr.mxu0 0.0
      %390 = vmatpush1.msra.mxu0 0.0
      %391 = vmatprep.subr.mxu0 0.0
      %392 = vmatpush1.msra.mxu0 0.0
      %393 = vmatprep.subr.mxu0 0.0
      %394 = vmatpush1.msra.mxu0 0.0
      %395 = vmatprep.subr.mxu0 0.0
      %396 = vmatpush1.msra.mxu0 0.0
      %397 = vmatprep.mubr.f32.mxu0 0.0
      %398 = vmatmul.mubr.f32.gmra.mrb[0].mxu0 %v331
      %v399 = vpop.f32.mrb[0].mxu0
      %v400 = vadd.f32 0.0, %v399
      %v401 = vpop.f32.mrb[0].mxu0
      %402 = vdwg.mxu0
      %404 = vset.pattern.permute.xlu0 0
      %405 = vperm.xlu0 %404, %v400
      %v406 = vpop.permute.xlu0 %405
      %v408 = vld [vmem:[%s2] sm:$0xff]
      %v410 = vsel %vm329, %v408, 0
      %412 = vmatprep.subr.mxu0 %v320
      %413 = vmatpush1.msra.mxu0 %v319
      %414 = vmatprep.subr.mxu0 0.0
      %415 = vmatpush1.msra.mxu0 0.0
      %416 = vmatprep.subr.mxu0 0.0
      %417 = vmatpush1.msra.mxu0 0.0
      %418 = vmatprep.subr.mxu0 0.0
      %419 = vmatpush1.msra.mxu0 0.0
      %420 = vmatprep.subr.mxu0 0.0
      %421 = vmatpush1.msra.mxu0 0.0
      %422 = vmatprep.subr.mxu0 0.0
      %423 = vmatpush1.msra.mxu0 0.0
      %424 = vmatprep.subr.mxu0 0.0
      %425 = vmatpush1.msra.mxu0 0.0
      %426 = vmatprep.subr.mxu0 0.0
      %427 = vmatpush1.msra.mxu0 0.0
      %428 = vmatprep.subr.mxu0 0.0
      %429 = vmatpush1.msra.mxu0 0.0
      %430 = vmatprep.subr.mxu0 0.0
      %431 = vmatpush1.msra.mxu0 0.0
      %432 = vmatprep.subr.mxu0 0.0
      %433 = vmatpush1.msra.mxu0 0.0
      %434 = vmatprep.subr.mxu0 0.0
      %435 = vmatpush1.msra.mxu0 0.0
      %436 = vmatprep.subr.mxu0 0.0
      %437 = vmatpush1.msra.mxu0 0.0
      %438 = vmatprep.subr.mxu0 0.0
      %439 = vmatpush1.msra.mxu0 0.0
      %440 = vmatprep.subr.mxu0 0.0
      %441 = vmatpush1.msra.mxu0 0.0
      %442 = vmatprep.subr.mxu0 0.0
      %443 = vmatpush1.msra.mxu0 0.0
      %444 = vmatprep.subr.mxu0 0.0
      %445 = vmatpush1.msra.mxu0 0.0
      %446 = vmatprep.subr.mxu0 0.0
      %447 = vmatpush1.msra.mxu0 0.0
      %448 = vmatprep.subr.mxu0 0.0
      %449 = vmatpush1.msra.mxu0 0.0
      %450 = vmatprep.subr.mxu0 0.0
      %451 = vmatpush1.msra.mxu0 0.0
      %452 = vmatprep.subr.mxu0 0.0
      %453 = vmatpush1.msra.mxu0 0.0
      %454 = vmatprep.subr.mxu0 0.0
      %455 = vmatpush1.msra.mxu0 0.0
      %456 = vmatprep.subr.mxu0 0.0
      %457 = vmatpush1.msra.mxu0 0.0
      %458 = vmatprep.subr.mxu0 0.0
      %459 = vmatpush1.msra.mxu0 0.0
      %460 = vmatprep.subr.mxu0 0.0
      %461 = vmatpush1.msra.mxu0 0.0
      %462 = vmatprep.subr.mxu0 0.0
      %463 = vmatpush1.msra.mxu0 0.0
      %464 = vmatprep.subr.mxu0 0.0
      %465 = vmatpush1.msra.mxu0 0.0
      %466 = vmatprep.subr.mxu0 0.0
      %467 = vmatpush1.msra.mxu0 0.0
      %468 = vmatprep.subr.mxu0 0.0
      %469 = vmatpush1.msra.mxu0 0.0
      %470 = vmatprep.subr.mxu0 0.0
      %471 = vmatpush1.msra.mxu0 0.0
      %472 = vmatprep.subr.mxu0 0.0
      %473 = vmatpush1.msra.mxu0 0.0
      %474 = vmatprep.subr.mxu0 0.0
      %475 = vmatpush1.msra.mxu0 0.0
      %476 = vmatprep.mubr.f32.mxu0 0.0
      %477 = vmatmul.mubr.f32.gmra.mrb[0].mxu0 %v410
      %v478 = vpop.f32.mrb[0].mxu0
      %v479 = vadd.f32 0.0, %v478
      %v480 = vpop.f32.mrb[0].mxu0
      %v481 = vadd.f32 0.0, %v480
      %482 = vdwg.mxu0
      %v483 = vld [vmem:[%s273] sm:$0xff]
      %v484 = vld [vmem:[%s273 + $0x8] sm:$0xff]
      %v485 = vld [vmem:[%s273 + $0x10] sm:$0xff]
      %v486 = vadd.s32 %v307, 4294967290
      %v487 = vadd.s32 %v308, 4294967290
      %vm488 = vcmp.ge.s32.totalorder %v486, 0
      %vm489 = vcmp.ge.s32.totalorder %v487, 0
      %vm490 = vcmp.lt.s32.totalorder %v486, 16
      %vm491 = vcmp.lt.s32.totalorder %v487, 16
      %vm492 = vmand %vm488, %vm490
      %vm493 = vmand %vm489, %vm491
      %v494 = vsel %vm492, 1, 0
      %v495 = vsel %vm493, 1, 0
      %vm496 = vcmp.eq.s32.totalorder %v494, 1
      %vm497 = vcmp.eq.s32.totalorder %v495, 1
      %501 = vrot.lane.b32.xlu0 %v483, 26
      %v502 = vpop.permute.xlu0 %501
      %503 = vrot.lane.b32.xlu0 %v484, 26
      %v504 = vpop.permute.xlu0 %503
      %505 = vrot.lane.b32.xlu0 %v485, 26
      %v506 = vpop.permute.xlu0 %505
      %vm507 = vcmask 211968
      %v508 = vsel %vm507, %v502, %v504
      %v509 = vsel %vm507, %v504, %v506
      %v512 = vsel %vm496, %v508, 0.0
      %v513 = vsel %vm497, %v509, 0.0
      %v514 = vadd.s32 %v307, 6
      %v515 = vadd.s32 %v308, 6
      %vm516 = vcmp.ge.s32.totalorder %v514, 0
      %vm517 = vcmp.ge.s32.totalorder %v515, 0
      %vm518 = vcmp.lt.s32.totalorder %v514, 16
      %vm519 = vcmp.lt.s32.totalorder %v515, 16
      %vm520 = vmand %vm516, %vm518
      %vm521 = vmand %vm517, %vm519
      %v522 = vsel %vm520, 1, 0
      %v523 = vsel %vm521, 1, 0
      %vm524 = vcmp.eq.s32.totalorder %v522, 1
      %vm525 = vcmp.eq.s32.totalorder %v523, 1
      %526 = vrot.lane.b32.xlu0 %v483, 14
      %v527 = vpop.permute.xlu0 %526
      %528 = vrot.lane.b32.xlu0 %v484, 14
      %v529 = vpop.permute.xlu0 %528
      %530 = vrot.lane.b32.xlu0 %v485, 14
      %v531 = vpop.permute.xlu0 %530
      %vm532 = vcmask 113664
      %v533 = vsel %vm532, %v527, %v529
      %v534 = vsel %vm532, %v529, %v531
      %v537 = vsel %vm524, %v533, 0.0
      %v538 = vsel %vm525, %v534, 0.0
      %539 = vrot.lane.b32.xlu0 %v279, 58
      %v540 = vpop.permute.xlu0 %539
      %541 = vrot.lane.b32.xlu0 %v280, 58
      %v542 = vpop.permute.xlu0 %541
      %543 = vrot.lane.b32.xlu0 %v281, 58
      %v544 = vpop.permute.xlu0 %543
      %vm545 = vcmask 474112
      %v546 = vsel %vm545, %v540, %v542
      %v547 = vsel %vm545, %v542, %v544
      %v550 = vsel %vm496, %v546, 0.0
      %v551 = vsel %vm497, %v547, 0.0
      %552 = vrot.lane.b32.xlu0 %v279, 46
      %v553 = vpop.permute.xlu0 %552
      %554 = vrot.lane.b32.xlu0 %v280, 46
      %v555 = vpop.permute.xlu0 %554
      %556 = vrot.lane.b32.xlu0 %v281, 46
      %v557 = vpop.permute.xlu0 %556
      %vm558 = vcmask 375808
      %v559 = vsel %vm558, %v553, %v555
      %v560 = vsel %vm558, %v555, %v557
      %v563 = vsel %vm524, %v559, 0.0
      %v564 = vsel %vm525, %v560, 0.0
      %v565 = vld [vmem:[%s273 + $0x18] sm:$0xff]
      %v566 = vld [vmem:[%s273 + $0x20] sm:$0xff]
      %569 = vrot.lane.b32.xlu0 %v485, 90
      %v570 = vpop.permute.xlu0 %569
      %571 = vrot.lane.b32.xlu0 %v565, 90
      %v572 = vpop.permute.xlu0 %571
      %573 = vrot.lane.b32.xlu0 %v566, 90
      %v574 = vpop.permute.xlu0 %573
      %vm575 = vcmask 736256
      %v576 = vsel %vm575, %v570, %v572
      %v577 = vsel %vm575, %v572, %v574
      %v580 = vsel %vm496, %v576, 0.0
      %v581 = vsel %vm497, %v577, 0.0
      %582 = vrot.lane.b32.xlu0 %v485, 78
      %v583 = vpop.permute.xlu0 %582
      %584 = vrot.lane.b32.xlu0 %v565, 78
      %v585 = vpop.permute.xlu0 %584
      %586 = vrot.lane.b32.xlu0 %v566, 78
      %v587 = vpop.permute.xlu0 %586
      %vm588 = vcmask 637952
      %v589 = vsel %vm588, %v583, %v585
      %v590 = vsel %vm588, %v585, %v587
      %v593 = vsel %vm524, %v589, 0.0
      %v594 = vsel %vm525, %v590, 0.0
      %595 = vrot.lane.b32.xlu0 %v483, 20
      %v596 = vpop.permute.xlu0 %595
      %597 = vrot.lane.b32.xlu0 %v484, 20
      %v598 = vpop.permute.xlu0 %597
      %599 = vrot.lane.b32.xlu0 %v485, 20
      %v600 = vpop.permute.xlu0 %599
      %vm601 = vcmask 162816
      %v602 = vsel %vm601, %v596, %v598
      %v603 = vsel %vm601, %v598, %v600
      %606 = vrot.lane.b32.xlu0 %v485, 84
      %v607 = vpop.permute.xlu0 %606
      %608 = vrot.lane.b32.xlu0 %v565, 84
      %v609 = vpop.permute.xlu0 %608
      %610 = vrot.lane.b32.xlu0 %v566, 84
      %v611 = vpop.permute.xlu0 %610
      %vm612 = vcmask 687104
      %v613 = vsel %vm612, %v607, %v609
      %v614 = vsel %vm612, %v609, %v611
      %v617 = vld [vmem:[%s3] sm:$0xff]
      %vm618 = vcmask 588800
      %v620 = vsel %vm618, %v617, 0
      %622 = vmatprep.subr.mxu0 %v513
      %623 = vmatpush1.msra.mxu0 %v512
      %624 = vmatprep.subr.mxu0 %v603
      %625 = vmatpush1.msra.mxu0 %v602
      %626 = vmatprep.subr.mxu0 %v538
      %627 = vmatpush1.msra.mxu0 %v537
      %628 = vmatprep.subr.mxu0 %v551
      %629 = vmatpush1.msra.mxu0 %v550
      %630 = vmatprep.subr.mxu0 %v320
      %631 = vmatpush1.msra.mxu0 %v319
      %632 = vmatprep.subr.mxu0 %v564
      %633 = vmatpush1.msra.mxu0 %v563
      %634 = vmatprep.subr.mxu0 %v581
      %635 = vmatpush1.msra.mxu0 %v580
      %636 = vmatprep.subr.mxu0 %v614
      %637 = vmatpush1.msra.mxu0 %v613
      %638 = vmatprep.subr.mxu0 %v594
      %639 = vmatpush1.msra.mxu0 %v593
      %640 = vmatprep.subr.mxu0 0.0
      %641 = vmatpush1.msra.mxu0 0.0
      %642 = vmatprep.subr.mxu0 0.0
      %643 = vmatpush1.msra.mxu0 0.0
      %644 = vmatprep.subr.mxu0 0.0
      %645 = vmatpush1.msra.mxu0 0.0
      %646 = vmatprep.subr.mxu0 0.0
      %647 = vmatpush1.msra.mxu0 0.0
      %648 = vmatprep.subr.mxu0 0.0
      %649 = vmatpush1.msra.mxu0 0.0
      %650 = vmatprep.subr.mxu0 0.0
      %651 = vmatpush1.msra.mxu0 0.0
      %652 = vmatprep.subr.mxu0 0.0
      %653 = vmatpush1.msra.mxu0 0.0
      %654 = vmatprep.subr.mxu0 0.0
      %655 = vmatpush1.msra.mxu0 0.0
      %656 = vmatprep.subr.mxu0 0.0
      %657 = vmatpush1.msra.mxu0 0.0
      %658 = vmatprep.subr.mxu0 0.0
      %659 = vmatpush1.msra.mxu0 0.0
      %660 = vmatprep.subr.mxu0 0.0
      %661 = vmatpush1.msra.mxu0 0.0
      %662 = vmatprep.subr.mxu0 0.0
      %663 = vmatpush1.msra.mxu0 0.0
      %664 = vmatprep.subr.mxu0 0.0
      %665 = vmatpush1.msra.mxu0 0.0
      %666 = vmatprep.subr.mxu0 0.0
      %667 = vmatpush1.msra.mxu0 0.0
      %668 = vmatprep.subr.mxu0 0.0
      %669 = vmatpush1.msra.mxu0 0.0
      %670 = vmatprep.subr.mxu0 0.0
      %671 = vmatpush1.msra.mxu0 0.0
      %672 = vmatprep.subr.mxu0 0.0
      %673 = vmatpush1.msra.mxu0 0.0
      %674 = vmatprep.subr.mxu0 0.0
      %675 = vmatpush1.msra.mxu0 0.0
      %676 = vmatprep.subr.mxu0 0.0
      %677 = vmatpush1.msra.mxu0 0.0
      %678 = vmatprep.subr.mxu0 0.0
      %679 = vmatpush1.msra.mxu0 0.0
      %680 = vmatprep.subr.mxu0 0.0
      %681 = vmatpush1.msra.mxu0 0.0
      %682 = vmatprep.subr.mxu0 0.0
      %683 = vmatpush1.msra.mxu0 0.0
      %684 = vmatprep.subr.mxu0 0.0
      %685 = vmatpush1.msra.mxu0 0.0
      %686 = vmatprep.mubr.f32.mxu0 0.0
      %687 = vmatmul.mubr.f32.gmra.mrb[0].mxu0 %v620
      %v688 = vpop.f32.mrb[0].mxu0
      %v689 = vadd.f32 0.0, %v688
      %v690 = vpop.f32.mrb[0].mxu0
      %v691 = vadd.f32 0.0, %v690
      %692 = vdwg.mxu0
      %v693 = vld [vmem:[%s273] sm:$0xff]
      %v694 = vld [vmem:[%s273 + $0x8] sm:$0xff]
      %v695 = vadd.s32 %v307, 4294967284
      %v696 = vadd.s32 %v308, 4294967284
      %vm697 = vcmp.ge.s32.totalorder %v695, 0
      %vm698 = vcmp.ge.s32.totalorder %v696, 0
      %vm699 = vcmp.lt.s32.totalorder %v695, 16
      %vm700 = vcmp.lt.s32.totalorder %v696, 16
      %vm701 = vmand %vm697, %vm699
      %vm702 = vmand %vm698, %vm700
      %v703 = vsel %vm701, 1, 0
      %v704 = vsel %vm702, 1, 0
      %vm705 = vcmp.eq.s32.totalorder %v703, 1
      %vm706 = vcmp.eq.s32.totalorder %v704, 1
      %v707 = vsel %vm705, %v693, 0.0
      %v708 = vsel %vm706, %v694, 0.0
      %v709 = vadd.s32 %v307, 12
      %v710 = vadd.s32 %v308, 12
      %vm711 = vcmp.ge.s32.totalorder %v709, 0
      %vm712 = vcmp.ge.s32.totalorder %v710, 0
      %vm713 = vcmp.lt.s32.totalorder %v709, 16
      %vm714 = vcmp.lt.s32.totalorder %v710, 16
      %vm715 = vmand %vm711, %vm713
      %vm716 = vmand %vm712, %vm714
      %v717 = vsel %vm715, 1, 0
      %v718 = vsel %vm716, 1, 0
      %vm719 = vcmp.eq.s32.totalorder %v717, 1
      %vm720 = vcmp.eq.s32.totalorder %v718, 1
      %721 = vrot.lane.b32.xlu0 %v483, 104
      %v722 = vpop.permute.xlu0 %721
      %723 = vrot.lane.b32.xlu0 %v484, 104
      %v724 = vpop.permute.xlu0 %723
      %725 = vrot.lane.b32.xlu0 %v485, 104
      %v726 = vpop.permute.xlu0 %725
      %vm727 = vcmask 850944
      %v728 = vsel %vm727, %v722, %v724
      %v729 = vsel %vm727, %v724, %v726
      %v732 = vsel %vm719, %v728, 0.0
      %v733 = vsel %vm720, %v729, 0.0
      %734 = vrot.lane.b32.xlu0 %v279, 64
      %v735 = vpop.permute.xlu0 %734
      %736 = vrot.lane.b32.xlu0 %v280, 64
      %v737 = vpop.permute.xlu0 %736
      %738 = vrot.lane.b32.xlu0 %v281, 64
      %v739 = vpop.permute.xlu0 %738
      %vm740 = vcmask 523264
      %v741 = vsel %vm740, %v735, %v737
      %v742 = vsel %vm740, %v737, %v739
      %v745 = vsel %vm705, %v741, 0.0
      %v746 = vsel %vm706, %v742, 0.0
      %747 = vrot.lane.b32.xlu0 %v279, 40
      %v748 = vpop.permute.xlu0 %747
      %749 = vrot.lane.b32.xlu0 %v280, 40
      %v750 = vpop.permute.xlu0 %749
      %751 = vrot.lane.b32.xlu0 %v281, 40
      %v752 = vpop.permute.xlu0 %751
      %vm753 = vcmask 326656
      %v754 = vsel %vm753, %v748, %v750
      %v755 = vsel %vm753, %v750, %v752
      %v758 = vsel %vm719, %v754, 0.0
      %v759 = vsel %vm720, %v755, 0.0
      %v760 = vsel %vm705, %v565, 0.0
      %v761 = vsel %vm706, %v566, 0.0
      %v762 = vld [vmem:[%s273 + $0x18] sm:$0xff]
      %v763 = vld [vmem:[%s273 + $0x20] sm:$0xff]
      %v764 = vld [vmem:[%s273 + $0x28] sm:$0xff]
      %768 = vrot.lane.b32.xlu0 %v762, 104
      %v769 = vpop.permute.xlu0 %768
      %770 = vrot.lane.b32.xlu0 %v763, 104
      %v771 = vpop.permute.xlu0 %770
      %772 = vrot.lane.b32.xlu0 %v764, 104
      %v773 = vpop.permute.xlu0 %772
      %v774 = vsel %vm727, %v769, %v771
      %v775 = vsel %vm727, %v771, %v773
      %v778 = vsel %vm719, %v774, 0.0
      %v779 = vsel %vm720, %v775, 0.0
      %780 = vrot.lane.b32.xlu0 %v483, 116
      %v781 = vpop.permute.xlu0 %780
      %782 = vrot.lane.b32.xlu0 %v484, 116
      %v783 = vpop.permute.xlu0 %782
      %784 = vrot.lane.b32.xlu0 %v485, 116
      %v785 = vpop.permute.xlu0 %784
      %vm786 = vcmask 949248
      %v787 = vsel %vm786, %v781, %v783
      %v788 = vsel %vm786, %v783, %v785
      %791 = vrot.lane.b32.xlu0 %v762, 116
      %v792 = vpop.permute.xlu0 %791
      %793 = vrot.lane.b32.xlu0 %v763, 116
      %v794 = vpop.permute.xlu0 %793
      %795 = vrot.lane.b32.xlu0 %v764, 116
      %v796 = vpop.permute.xlu0 %795
      %v797 = vsel %vm786, %v792, %v794
      %v798 = vsel %vm786, %v794, %v796
      %v801 = vld [vmem:[%s4] sm:$0xff]
      %v803 = vsel %vm618, %v801, 0
      %805 = vmatprep.subr.mxu0 %v708
      %806 = vmatpush1.msra.mxu0 %v707
      %807 = vmatprep.subr.mxu0 %v788
      %808 = vmatpush1.msra.mxu0 %v787
      %809 = vmatprep.subr.mxu0 %v733
      %810 = vmatpush1.msra.mxu0 %v732
      %811 = vmatprep.subr.mxu0 %v746
      %812 = vmatpush1.msra.mxu0 %v745
      %813 = vmatprep.subr.mxu0 %v320
      %814 = vmatpush1.msra.mxu0 %v319
      %815 = vmatprep.subr.mxu0 %v759
      %816 = vmatpush1.msra.mxu0 %v758
      %817 = vmatprep.subr.mxu0 %v761
      %818 = vmatpush1.msra.mxu0 %v760
      %819 = vmatprep.subr.mxu0 %v798
      %820 = vmatpush1.msra.mxu0 %v797
      %821 = vmatprep.subr.mxu0 %v779
      %822 = vmatpush1.msra.mxu0 %v778
      %823 = vmatprep.subr.mxu0 0.0
      %824 = vmatpush1.msra.mxu0 0.0
      %825 = vmatprep.subr.mxu0 0.0
      %826 = vmatpush1.msra.mxu0 0.0
      %827 = vmatprep.subr.mxu0 0.0
      %828 = vmatpush1.msra.mxu0 0.0
      %829 = vmatprep.subr.mxu0 0.0
      %830 = vmatpush1.msra.mxu0 0.0
      %831 = vmatprep.subr.mxu0 0.0
      %832 = vmatpush1.msra.mxu0 0.0
      %833 = vmatprep.subr.mxu0 0.0
      %834 = vmatpush1.msra.mxu0 0.0
      %835 = vmatprep.subr.mxu0 0.0
      %836 = vmatpush1.msra.mxu0 0.0
      %837 = vmatprep.subr.mxu0 0.0
      %838 = vmatpush1.msra.mxu0 0.0
      %839 = vmatprep.subr.mxu0 0.0
      %840 = vmatpush1.msra.mxu0 0.0
      %841 = vmatprep.subr.mxu0 0.0
      %842 = vmatpush1.msra.mxu0 0.0
      %843 = vmatprep.subr.mxu0 0.0
      %844 = vmatpush1.msra.mxu0 0.0
      %845 = vmatprep.subr.mxu0 0.0
      %846 = vmatpush1.msra.mxu0 0.0
      %847 = vmatprep.subr.mxu0 0.0
      %848 = vmatpush1.msra.mxu0 0.0
      %849 = vmatprep.subr.mxu0 0.0
      %850 = vmatpush1.msra.mxu0 0.0
      %851 = vmatprep.subr.mxu0 0.0
      %852 = vmatpush1.msra.mxu0 0.0
      %853 = vmatprep.subr.mxu0 0.0
      %854 = vmatpush1.msra.mxu0 0.0
      %855 = vmatprep.subr.mxu0 0.0
      %856 = vmatpush1.msra.mxu0 0.0
      %857 = vmatprep.subr.mxu0 0.0
      %858 = vmatpush1.msra.mxu0 0.0
      %859 = vmatprep.subr.mxu0 0.0
      %860 = vmatpush1.msra.mxu0 0.0
      %861 = vmatprep.subr.mxu0 0.0
      %862 = vmatpush1.msra.mxu0 0.0
      %863 = vmatprep.subr.mxu0 0.0
      %864 = vmatpush1.msra.mxu0 0.0
      %865 = vmatprep.subr.mxu0 0.0
      %866 = vmatpush1.msra.mxu0 0.0
      %867 = vmatprep.subr.mxu0 0.0
      %868 = vmatpush1.msra.mxu0 0.0
      %869 = vmatprep.mubr.f32.mxu0 0.0
      %870 = vmatmul.mubr.f32.gmra.mrb[0].mxu0 %v803
      %v871 = vpop.f32.mrb[0].mxu0
      %v872 = vadd.f32 0.0, %v871
      %v873 = vpop.f32.mrb[0].mxu0
      %v874 = vadd.f32 0.0, %v873
      %875 = vdwg.mxu0
      %v876 = vld [vmem:[%s5] sm:$0xff]
      %v878 = vsel %vm329, %v876, 0
      %880 = vmatprep.subr.mxu0 %v320
      %881 = vmatpush1.msra.mxu0 %v319
      %882 = vmatprep.subr.mxu0 0.0
      %883 = vmatpush1.msra.mxu0 0.0
      %884 = vmatprep.subr.mxu0 0.0
      %885 = vmatpush1.msra.mxu0 0.0
      %886 = vmatprep.subr.mxu0 0.0
      %887 = vmatpush1.msra.mxu0 0.0
      %888 = vmatprep.subr.mxu0 0.0
      %889 = vmatpush1.msra.mxu0 0.0
      %890 = vmatprep.subr.mxu0 0.0
      %891 = vmatpush1.msra.mxu0 0.0
      %892 = vmatprep.subr.mxu0 0.0
      %893 = vmatpush1.msra.mxu0 0.0
      %894 = vmatprep.subr.mxu0 0.0
      %895 = vmatpush1.msra.mxu0 0.0
      %896 = vmatprep.subr.mxu0 0.0
      %897 = vmatpush1.msra.mxu0 0.0
      %898 = vmatprep.subr.mxu0 0.0
      %899 = vmatpush1.msra.mxu0 0.0
      %900 = vmatprep.subr.mxu0 0.0
      %901 = vmatpush1.msra.mxu0 0.0
      %902 = vmatprep.subr.mxu0 0.0
      %903 = vmatpush1.msra.mxu0 0.0
      %904 = vmatprep.subr.mxu0 0.0
      %905 = vmatpush1.msra.mxu0 0.0
      %906 = vmatprep.subr.mxu0 0.0
      %907 = vmatpush1.msra.mxu0 0.0
      %908 = vmatprep.subr.mxu0 0.0
      %909 = vmatpush1.msra.mxu0 0.0
      %910 = vmatprep.subr.mxu0 0.0
      %911 = vmatpush1.msra.mxu0 0.0
      %912 = vmatprep.subr.mxu0 0.0
      %913 = vmatpush1.msra.mxu0 0.0
      %914 = vmatprep.subr.mxu0 0.0
      %915 = vmatpush1.msra.mxu0 0.0
      %916 = vmatprep.subr.mxu0 0.0
      %917 = vmatpush1.msra.mxu0 0.0
      %918 = vmatprep.subr.mxu0 0.0
      %919 = vmatpush1.msra.mxu0 0.0
      %920 = vmatprep.subr.mxu0 0.0
      %921 = vmatpush1.msra.mxu0 0.0
      %922 = vmatprep.subr.mxu0 0.0
      %923 = vmatpush1.msra.mxu0 0.0
      %924 = vmatprep.subr.mxu0 0.0
      %925 = vmatpush1.msra.mxu0 0.0
      %926 = vmatprep.subr.mxu0 0.0
      %927 = vmatpush1.msra.mxu0 0.0
      %928 = vmatprep.subr.mxu0 0.0
      %929 = vmatpush1.msra.mxu0 0.0
      %930 = vmatprep.subr.mxu0 0.0
      %931 = vmatpush1.msra.mxu0 0.0
      %932 = vmatprep.subr.mxu0 0.0
      %933 = vmatpush1.msra.mxu0 0.0
      %934 = vmatprep.subr.mxu0 0.0
      %935 = vmatpush1.msra.mxu0 0.0
      %936 = vmatprep.subr.mxu0 0.0
      %937 = vmatpush1.msra.mxu0 0.0
      %938 = vmatprep.subr.mxu0 0.0
      %939 = vmatpush1.msra.mxu0 0.0
      %940 = vmatprep.subr.mxu0 0.0
      %941 = vmatpush1.msra.mxu0 0.0
      %942 = vmatprep.subr.mxu0 0.0
      %943 = vmatpush1.msra.mxu0 0.0
      %944 = vmatprep.mubr.f32.mxu0 0.0
      %945 = vmatmul.mubr.f32.gmra.mrb[0].mxu0 %v878
      %v946 = vpop.f32.mrb[0].mxu0
      %v947 = vadd.f32 0.0, %v946
      %v948 = vpop.f32.mrb[0].mxu0
      %v949 = vadd.f32 0.0, %v948
      %950 = vdwg.mxu0
      %v951 = vld [vmem:[%s6] sm:$0xff]
      %v952 = vld [vmem:[%s6 + $0x8] sm:$0xff]
      %v953 = vld [vmem:[%s6 + $0x10] sm:$0xff]
      %v954 = vld [vmem:[%s6 + $0x18] sm:$0xff]
      %v955 = vld [vmem:[%s6 + $0x20] sm:$0xff]
      %957 = vset.pattern.permute.xlu0 0
      %958 = vperm.xlu0 %957, %v951
      %v959 = vpop.permute.xlu0 %958
      %962 = vset.pattern.permute.xlu0 0
      %963 = vperm.xlu0 %962, %v952
      %v964 = vpop.permute.xlu0 %963
      %967 = vset.pattern.permute.xlu0 0
      %968 = vperm.xlu0 %967, %v953
      %v969 = vpop.permute.xlu0 %968
      %972 = vset.pattern.permute.xlu0 0
      %973 = vperm.xlu0 %972, %v954
      %v974 = vpop.permute.xlu0 %973
      %977 = vset.pattern.permute.xlu0 0
      %978 = vperm.xlu0 %977, %v955
      %v979 = vpop.permute.xlu0 %978
      %v981 = vadd.f32 %v406, %v959
      %v982 = vadd.f32 %v479, %v964
      %v983 = vadd.f32 %v481, %v964
      %v984 = vadd.f32 %v689, %v969
      %v985 = vadd.f32 %v691, %v969
      %v986 = vadd.f32 %v872, %v974
      %v987 = vadd.f32 %v874, %v974
      %v988 = vadd.f32 %v947, %v979
      %v989 = vadd.f32 %v949, %v979
      %v990 = vmax.f32 %v981, 0.0
      %v991 = vmax.f32 %v982, 0.0
      %v992 = vmax.f32 %v983, 0.0
      %v993 = vmax.f32 %v984, 0.0
      %v994 = vmax.f32 %v985, 0.0
      %v995 = vmax.f32 %v986, 0.0
      %v996 = vmax.f32 %v987, 0.0
      %v997 = vmax.f32 %v988, 0.0
      %v998 = vmax.f32 %v989, 0.0
      %999 = vst [vmem:[%s278] sm:$0xff] %v990
      %1000 = vst [vmem:[%s278 + $0x8] sm:$0xff] %v990
      %1001 = vst [vmem:[%s278 + $0x10] sm:$0xff] %v991
      %1002 = vst [vmem:[%s278 + $0x18] sm:$0xff] %v992
      %1003 = vst [vmem:[%s278 + $0x20] sm:$0xff] %v993
      %1004 = vst [vmem:[%s278 + $0x28] sm:$0xff] %v994
      %1005 = vst [vmem:[%s278 + $0x30] sm:$0xff] %v995
      %1006 = vst [vmem:[%s278 + $0x38] sm:$0xff] %v996
      %1007 = vst [vmem:[%s278 + $0x40] sm:$0xff] %v997
      %1008 = vst [vmem:[%s278 + $0x48] sm:$0xff] %v998
      %p1009 = scmp.lt.s32.totalorder %s18, 1
      %s1010 = scalar_select %p1009, %s18, 1
      %s1011 = smul.addr %s1010, 10
      %s1012 = smul.addr %s1011, 8
      %s1013 = scalar_lea.vmem %s7, %s1012
      // Predicated region
      $region49: #{aspp_forward.1} parent=47 // pred_check
        %p1014 = pneg %p188
      $region50: #{aspp_forward.1} parent=47 // pred_check_branch
        %1016 = sbr.rel (%p1014) target = $region52
      $region51: #{aspp_forward.1} parent=47 // pred_region
        _
      $region52: #{aspp_forward.1} parent=47 // pred_fallthru
        _
    $region48: #{aspp_forward.1} parent=5 // pred_fallthru
      _
    %p1017 = scmp.le.s32.totalorder 2, %s13
    // Predicated region
    $region53: #{aspp_forward.1} parent=5 // pred_check
      %p1018 = pneg %p1017
    $region54: #{aspp_forward.1} parent=5 // pred_check_branch
      %1020 = sbr.rel (%p1018) target = $region56
    $region55: #{aspp_forward.1} parent=5 // pred_region
      %s1021 = ssub.s32 %s13, 2
      // Predicated region
      $region57: #{aspp_forward.1} parent=55 // pred_check
        %p1022 = pneg %p194
      $region58: #{aspp_forward.1} parent=55 // pred_check_branch
        %1024 = sbr.rel (%p1022) target = $region60
      $region59: #{aspp_forward.1} parent=55 // pred_region
        %p1025 = scmp.lt.s32.totalorder %s19, 1
        %s1026 = scalar_select %p1025, %s19, 1
        %s1027 = smul.addr %s1026, 10
        %s1028 = smul.addr %s1027, 8
        %s1029 = scalar_lea.vmem %s7, %s1028
      $region60: #{aspp_forward.1} parent=55 // pred_fallthru
        _
    $region56: #{aspp_forward.1} parent=5 // pred_fallthru
      _
  $region6: #{aspp_forward.1} parent=0 // loop_footer
    %s17 = sadd.s32 1, %s13
  $region7: #{aspp_forward.1} parent=0 // loop_footer_branch
    %12 = sbr.rel target = $region3
  $region8: #{aspp_forward.1} parent=0 // loop_exit
    _

</llo_original>
